<compile_context>
chip_gen: v5e
topology: v5e:2x2
jax: 0.10.0
libtpu: 0.0.40
codegen_flags: <defaults>
</compile_context>

<pallas_src>
import functools

import jax
import jax.numpy as jnp
from jax import lax
from jax.experimental import pallas as pl
from jax.experimental.pallas import tpu as pltpu

_LANES = 128


def _mmd_partial_kernel(a_ref, asq_ref, b_ref, bsq_ref, ox_ref, oy_ref, *,
                        m, n, coef):
    """One tm-row block of the Gaussian kernel matrix K(c, c).

    Emits lane-folded (tm, 128) partial sums over the x-columns [0, m) and the
    y-columns [m, m+n).  Padded columns [m+n, P_col) are masked out.
    """
    a = a_ref[...]                                   # (tm, D)     MXU operand dtype
    b = b_ref[...]                                   # (P_col, D)  VMEM-resident
    ab = lax.dot_general(a, b, (((1,), (1,)), ((), ())),
                         preferred_element_type=jnp.float32)       # (tm, P_col) f32
    # exponent = -(||a_i||^2 + ||b_j||^2 - 2<a_i,b_j>) / D^2
    # asq/bsq arrive pre-scaled by -1/D^2; 2/D^2 is folded into one multiply.
    expo = jnp.minimum(asq_ref[...] + bsq_ref[...] + coef * ab, 0.0)
    k = jnp.exp(expo)                                              # (tm, P_col) f32

    tm, p = k.shape
    acc_x = jnp.zeros((tm, _LANES), jnp.float32)
    acc_y = jnp.zeros((tm, _LANES), jnp.float32)
    # Fold P_col columns into 128 lanes with plain VPU adds.  x-columns and
    # y-columns are contiguous ranges, so only chunks straddling m or m+n (and the
    # tail pad) need a mask; everything else is an un-masked add.
    for c0 in range(0, p, _LANES):
        kc = k[:, c0:c0 + _LANES]
        if c0 + _LANES <= m:                          # fully inside x-columns
            acc_x = acc_x + kc
        elif c0 >= m and c0 + _LANES <= m + n:        # fully inside y-columns
            acc_y = acc_y + kc
        else:                                         # boundary / tail-pad chunk
            col = lax.broadcasted_iota(jnp.int32, (1, _LANES), 1) + c0
            acc_x = acc_x + kc * (col < m).astype(jnp.float32)
            acc_y = acc_y + kc * ((col >= m) & (col < m + n)).astype(jnp.float32)
    ox_ref[...] = acc_x
    oy_ref[...] = acc_y


def _ceil_to(v, mult):
    return ((v + mult - 1) // mult) * mult


def _vmem_limit_bytes(tm, p_col, d, mxu_itemsize, buffered):
    b_bufs = 1 if buffered else 2
    need = (b_bufs * p_col * d * mxu_itemsize          # resident column operand
            + 2 * tm * d * mxu_itemsize                # row block (double-buffered)
            + 2 * tm * 4 + b_bufs * p_col * 4          # row / column norm vectors
            + 2 * 2 * tm * _LANES * 4                  # two (tm,128) outputs, 2 bufs
            + 3 * tm * p_col * 4)                      # ab / expo / k f32 live values
    need = int(need * 1.4) + (1 << 20)
    cap = 128 * 1024 * 1024
    try:
        cap = int(getattr(pltpu.get_tpu_info(), "vmem_capacity_bytes", cap))
    except Exception:
        pass
    return max(16 * 1024 * 1024, min(need, (cap * 7) // 8))


def compute_mmd(x, y, *, tm=128, mxu_dtype=None):
    """MMD^2 = mean Kxx + mean Kyy - 2 mean Kxy, all three terms in one pallas_call.

    x: (M, D) prior samples, y: (N, D) latents (same dtype).
    """
    M, D = x.shape
    N, Dy = y.shape
    assert D == Dy, "feature dims must match"
    assert x.dtype == y.dtype, "x and y must share a dtype"
    assert tm % 8 == 0 and tm >= 8

    if mxu_dtype is None:
        # bf16 MXU operands only once the kernel is MXU-bound (large D); small D
        # keeps the native dtype so the scalar loss stays ~f32 accurate.
        mxu_dtype = jnp.bfloat16 if D >= 256 else x.dtype
    mxu_itemsize = jnp.dtype(mxu_dtype).itemsize

    # Decoupled padding: columns only to the lane width, rows only to the row tile.
    P_col = _ceil_to(M + N, _LANES)
    P_row = _ceil_to(M + N, tm)
    P_max = max(P_col, P_row)
    parts = [x, y]
    if P_max > M + N:
        parts.append(jnp.zeros((P_max - (M + N), D), x.dtype))
    c = jnp.concatenate(parts, axis=0)                            # (P_max, D)

    c32 = c.astype(jnp.float32)
    neg_sq = -jnp.sum(c32 * c32, axis=-1) / float(D * D)          # -||.||^2 / D^2
    asq = neg_sq[:P_row, None]                                    # (P_row, 1) f32
    bsq = neg_sq[None, :P_col]                                    # (1, P_col) f32

    a_op = c[:P_row]
    b_op = c[:P_col]
    if mxu_dtype != c.dtype:
        a_op = a_op.astype(mxu_dtype)
        b_op = b_op.astype(mxu_dtype)

    grid = (P_row // tm,)
    kernel = functools.partial(_mmd_partial_kernel, m=M, n=N,
                               coef=2.0 / float(D * D))

    def build(buffered):
        resident = {"pipeline_mode": pl.Buffered(1)} if buffered else {}
        return pl.pallas_call(
            kernel,
            out_shape=(jax.ShapeDtypeStruct((P_row, _LANES), jnp.float32),
                       jax.ShapeDtypeStruct((P_row, _LANES), jnp.float32)),
            grid_spec=pltpu.PrefetchScalarGridSpec(
                num_scalar_prefetch=0,
                grid=grid,
                in_specs=[
                    pl.BlockSpec((tm, D), lambda i: (i, 0)),        # row block
                    pl.BlockSpec((tm, 1), lambda i: (i, 0)),        # row norms (-/D^2)
                    pl.BlockSpec((P_col, D), lambda i: (0, 0), **resident),
                    pl.BlockSpec((1, P_col), lambda i: (0, 0), **resident),
                ],
                out_specs=(
                    pl.BlockSpec((tm, _LANES), lambda i: (i, 0)),
                    pl.BlockSpec((tm, _LANES), lambda i: (i, 0)),
                ),
            ),
            compiler_params=pltpu.CompilerParams(
                dimension_semantics=("parallel",),
                vmem_limit_bytes=_vmem_limit_bytes(tm, P_col, D, mxu_itemsize,
                                                   buffered),
            ),
        )

    try:
        out_x, out_y = build(True)(a_op, asq, b_op, bsq)
    except Exception:
        # Fallback if single-buffering (Buffered(1)) of the resident operands is
        # not accepted by this backend version: plain double-buffered specs.
        out_x, out_y = build(False)(a_op, asq, b_op, bsq)

    # Rows 0..M-1 are x rows; rows M..M+N-1 are y rows (padded rows never read).
    s_xx = jnp.sum(out_x[:M])          # sum of Kxx
    s_xy = jnp.sum(out_y[:M])          # sum of Kxy
    s_yy = jnp.sum(out_y[M:M + N])     # sum of Kyy
    return s_xx / (M * M) + s_yy / (N * N) - 2.0 * s_xy / (M * N)


def mmd_loss(latents, key, *, num_samples=256, max_num_latents=4096):
    """Forward pass of MMDLoss (mask=None path).

    latents: (N, D) float array.
    """
    # TODO(synk): boolean-mask gather (latents[mask]) and randperm subsampling when
    # N > max_num_latents are data-dependent-shape ops; only the small-N, mask=None
    # path is implemented here.
    assert latents.shape[0] <= max_num_latents
    d = latents.shape[-1]
    z = jax.random.normal(key, (num_samples, d), dtype=latents.dtype)
    return compute_mmd(z, latents)


def mmd_loss_reference(latents, z):
    """Pure-JAX reference matching the PyTorch module exactly."""
    def gk(x, y):
        diff = x[:, None, :] - y[None, :, :]
        num = jnp.mean(diff ** 2, axis=2) / x.shape[-1]
        return jnp.exp(-num)
    return gk(z, z).mean() + gk(latents, latents).mean() - 2.0 * gk(z, latents).mean()


if __name__ == "__main__":
    key = jax.random.PRNGKey(0)
    k_lat, k_z = jax.random.split(key)

    # Small deterministic shapes: 128 latents of dim 32, 256 prior samples.
    N, D = 128, 32
    num_samples = 256
    latents = jax.random.normal(k_lat, (N, D), dtype=jnp.float32) * 0.5 + 0.1

    loss = mmd_loss(latents, k_z, num_samples=num_samples)
    loss = jax.block_until_ready(loss)

    # Sanity check against the pure-JAX reference (same z draw).
    z = jax.random.normal(k_z, (num_samples, D), dtype=jnp.float32)
    ref = mmd_loss_reference(latents, z)
    assert jnp.allclose(loss, ref, atol=2e-5, rtol=1e-4), (loss, ref)

    print("KERNEL_OK")
</pallas_src>

<mosaic_0001>
module attributes {stable_mosaic.version = 11 : i64} {
  func.func @_mmd_partial_kernel(%arg0: i32, %arg1: memref<128x32xf32, #tpu.memory_space<vmem>>, %arg2: memref<128x1xf32, #tpu.memory_space<vmem>>, %arg3: memref<384x32xf32, #tpu.memory_space<vmem>>, %arg4: memref<1x384xf32, #tpu.memory_space<vmem>>, %arg5: memref<128x128xf32, #tpu.memory_space<vmem>>, %arg6: memref<128x128xf32, #tpu.memory_space<vmem>>) attributes {dimension_semantics = [#tpu.dimension_semantics<parallel>], iteration_bounds = array<i64: 3>, scalar_prefetch = 0 : i64, scratch_operands = 0 : i64, tpu.core_type = #tpu.core_type<tc>, window_params = [{transform_indices = @transform_0, window_bounds = array<i64: 128, 32>}, {transform_indices = @transform_1, window_bounds = array<i64: 128, 1>}, {pipeline_mode = #tpu.pipeline_mode<synchronous>, transform_indices = @transform_2, window_bounds = array<i64: 384, 32>}, {pipeline_mode = #tpu.pipeline_mode<synchronous>, transform_indices = @transform_3, window_bounds = array<i64: 1, 384>}, {transform_indices = @transform_4, window_bounds = array<i64: 128, 128>}, {transform_indices = @transform_5, window_bounds = array<i64: 128, 128>}]} {
    %c0 = arith.constant 0 : index
    %c0_0 = arith.constant 0 : index
    %0 = vector.load %arg1[%c0, %c0_0] : memref<128x32xf32, #tpu.memory_space<vmem>>, vector<128x32xf32>
    %c0_1 = arith.constant 0 : index
    %c0_2 = arith.constant 0 : index
    %1 = vector.load %arg3[%c0_1, %c0_2] : memref<384x32xf32, #tpu.memory_space<vmem>>, vector<384x32xf32>
    %cst = arith.constant dense<0.000000e+00> : vector<128x384xf32>
    %2 = tpu.matmul %0, %1, %cst {dimension_numbers = #tpu.dot_dimension_numbers<[1], [1], [0], [0], [0, 0, 1, 0], [], []>} : vector<128x32xf32>, vector<384x32xf32>, vector<128x384xf32> -> vector<128x384xf32>
    %c0_3 = arith.constant 0 : index
    %c0_4 = arith.constant 0 : index
    %3 = vector.load %arg2[%c0_3, %c0_4] : memref<128x1xf32, #tpu.memory_space<vmem>>, vector<128x1xf32>
    %c0_5 = arith.constant 0 : index
    %c0_6 = arith.constant 0 : index
    %4 = vector.load %arg4[%c0_5, %c0_6] : memref<1x384xf32, #tpu.memory_space<vmem>>, vector<1x384xf32>
    %5 = vector.broadcast %3 : vector<128x1xf32> to vector<128x384xf32>
    %6 = vector.broadcast %4 : vector<1x384xf32> to vector<128x384xf32>
    %7 = arith.addf %5, %6 : vector<128x384xf32>
    %cst_7 = arith.constant 0.001953125 : f32
    %8 = vector.broadcast %cst_7 : f32 to vector<128x384xf32>
    %9 = arith.mulf %8, %2 : vector<128x384xf32>
    %10 = arith.addf %7, %9 : vector<128x384xf32>
    %cst_8 = arith.constant 0.000000e+00 : f32
    %11 = vector.broadcast %cst_8 : f32 to vector<128x384xf32>
    %12 = arith.minimumf %10, %11 : vector<128x384xf32>
    %13 = math.exp %12 : vector<128x384xf32>
    %cst_9 = arith.constant 0.000000e+00 : f32
    %14 = vector.broadcast %cst_9 : f32 to vector<128x128xf32>
    %cst_10 = arith.constant 0.000000e+00 : f32
    %15 = vector.broadcast %cst_10 : f32 to vector<128x128xf32>
    %16 = vector.extract_strided_slice %13 {offsets = [0, 0], sizes = [128, 128], strides = [1, 1]} : vector<128x384xf32> to vector<128x128xf32>
    %17 = arith.addf %14, %16 : vector<128x128xf32>
    %18 = vector.extract_strided_slice %13 {offsets = [0, 128], sizes = [128, 128], strides = [1, 1]} : vector<128x384xf32> to vector<128x128xf32>
    %19 = arith.addf %17, %18 : vector<128x128xf32>
    %20 = vector.extract_strided_slice %13 {offsets = [0, 256], sizes = [128, 128], strides = [1, 1]} : vector<128x384xf32> to vector<128x128xf32>
    %21 = arith.addf %15, %20 : vector<128x128xf32>
    %c0_11 = arith.constant 0 : index
    %c0_12 = arith.constant 0 : index
    %22 = vector.load %arg5[%c0_11, %c0_12] : memref<128x128xf32, #tpu.memory_space<vmem>>, vector<128x128xf32>
    tpu.vector_store %arg5[%c0_11, %c0_12], %19 {strides = array<i32>} : memref<128x128xf32, #tpu.memory_space<vmem>>, vector<128x128xf32>,
    %c0_13 = arith.constant 0 : index
    %c0_14 = arith.constant 0 : index
    %23 = vector.load %arg6[%c0_13, %c0_14] : memref<128x128xf32, #tpu.memory_space<vmem>>, vector<128x128xf32>
    tpu.vector_store %arg6[%c0_13, %c0_14], %21 {strides = array<i32>} : memref<128x128xf32, #tpu.memory_space<vmem>>, vector<128x128xf32>,
    return
  }
  func.func @transform_0(%arg0: i32) -> (i32, i32) {
    %c0_i32 = arith.constant 0 : i32
    %c0_i32_0 = arith.constant 0 : i32
    return %arg0, %c0_i32 : i32, i32
  }
  func.func @transform_1(%arg0: i32) -> (i32, i32) {
    %c0_i32 = arith.constant 0 : i32
    %c0_i32_0 = arith.constant 0 : i32
    return %arg0, %c0_i32 : i32, i32
  }
  func.func @transform_2(%arg0: i32) -> (i32, i32) {
    %c0_i32 = arith.constant 0 : i32
    %c0_i32_0 = arith.constant 0 : i32
    %c0_i32_1 = arith.constant 0 : i32
    return %c0_i32, %c0_i32_0 : i32, i32
  }
  func.func @transform_3(%arg0: i32) -> (i32, i32) {
    %c0_i32 = arith.constant 0 : i32
    %c0_i32_0 = arith.constant 0 : i32
    %c0_i32_1 = arith.constant 0 : i32
    return %c0_i32, %c0_i32_0 : i32, i32
  }
  func.func @transform_4(%arg0: i32) -> (i32, i32) {
    %c0_i32 = arith.constant 0 : i32
    %c0_i32_0 = arith.constant 0 : i32
    return %arg0, %c0_i32 : i32, i32
  }
  func.func @transform_5(%arg0: i32) -> (i32, i32) {
    %c0_i32 = arith.constant 0 : i32
    %c0_i32_0 = arith.constant 0 : i32
    return %arg0, %c0_i32 : i32, i32
  }
}

module attributes {stable_mosaic.version = 11 : i64} {
  func.func @_mmd_partial_kernel(%arg0: i32, %arg1: memref<128x32xf32, #tpu.memory_space<vmem>>, %arg2: memref<128x1xf32, #tpu.memory_space<vmem>>, %arg3: memref<384x32xf32, #tpu.memory_space<vmem>>, %arg4: memref<1x384xf32, #tpu.memory_space<vmem>>, %arg5: memref<128x128xf32, #tpu.memory_space<vmem>>, %arg6: memref<128x128xf32, #tpu.memory_space<vmem>>) attributes {dimension_semantics = [#tpu.dimension_semantics<parallel>], iteration_bounds = array<i64: 3>, scalar_prefetch = 0 : i64, scratch_operands = 0 : i64, tpu.core_type = #tpu.core_type<tc>, window_params = [{transform_indices = @transform_0, window_bounds = array<i64: 128, 32>}, {transform_indices = @transform_1, window_bounds = array<i64: 128, 1>}, {pipeline_mode = #tpu.pipeline_mode<synchronous>, transform_indices = @transform_2, window_bounds = array<i64: 384, 32>}, {pipeline_mode = #tpu.pipeline_mode<synchronous>, transform_indices = @transform_3, window_bounds = array<i64: 1, 384>}, {transform_indices = @transform_4, window_bounds = array<i64: 128, 128>}, {transform_indices = @transform_5, window_bounds = array<i64: 128, 128>}]} {
    %c0 = arith.constant 0 : index
    %c0_0 = arith.constant 0 : index
    %0 = vector.load %arg1[%c0, %c0_0] : memref<128x32xf32, #tpu.memory_space<vmem>>, vector<128x32xf32>
    %c0_1 = arith.constant 0 : index
    %c0_2 = arith.constant 0 : index
    %1 = vector.load %arg3[%c0_1, %c0_2] : memref<384x32xf32, #tpu.memory_space<vmem>>, vector<384x32xf32>
    %cst = arith.constant dense<0.000000e+00> : vector<128x384xf32>
    %2 = tpu.matmul %0, %1, %cst {dimension_numbers = #tpu.dot_dimension_numbers<[1], [1], [0], [0], [0, 0, 1, 0], [], []>} : vector<128x32xf32>, vector<384x32xf32>, vector<128x384xf32> -> vector<128x384xf32>
    %c0_3 = arith.constant 0 : index
    %c0_4 = arith.constant 0 : index
    %3 = vector.load %arg2[%c0_3, %c0_4] : memref<128x1xf32, #tpu.memory_space<vmem>>, vector<128x1xf32>
    %c0_5 = arith.constant 0 : index
    %c0_6 = arith.constant 0 : index
    %4 = vector.load %arg4[%c0_5, %c0_6] : memref<1x384xf32, #tpu.memory_space<vmem>>, vector<1x384xf32>
    %5 = vector.broadcast %3 : vector<128x1xf32> to vector<128x384xf32>
    %6 = vector.broadcast %4 : vector<1x384xf32> to vector<128x384xf32>
    %7 = arith.addf %5, %6 : vector<128x384xf32>
    %cst_7 = arith.constant 0.001953125 : f32
    %8 = vector.broadcast %cst_7 : f32 to vector<128x384xf32>
    %9 = arith.mulf %8, %2 : vector<128x384xf32>
    %10 = arith.addf %7, %9 : vector<128x384xf32>
    %cst_8 = arith.constant 0.000000e+00 : f32
    %11 = vector.broadcast %cst_8 : f32 to vector<128x384xf32>
    %12 = arith.minimumf %10, %11 : vector<128x384xf32>
    %13 = math.exp %12 : vector<128x384xf32>
    %cst_9 = arith.constant 0.000000e+00 : f32
    %14 = vector.broadcast %cst_9 : f32 to vector<128x128xf32>
    %cst_10 = arith.constant 0.000000e+00 : f32
    %15 = vector.broadcast %cst_10 : f32 to vector<128x128xf32>
    %16 = vector.extract_strided_slice %13 {offsets = [0, 0], sizes = [128, 128], strides = [1, 1]} : vector<128x384xf32> to vector<128x128xf32>
    %17 = arith.addf %14, %16 : vector<128x128xf32>
    %18 = vector.extract_strided_slice %13 {offsets = [0, 128], sizes = [128, 128], strides = [1, 1]} : vector<128x384xf32> to vector<128x128xf32>
    %19 = arith.addf %17, %18 : vector<128x128xf32>
    %20 = vector.extract_strided_slice %13 {offsets = [0, 256], sizes = [128, 128], strides = [1, 1]} : vector<128x384xf32> to vector<128x128xf32>
    %21 = arith.addf %15, %20 : vector<128x128xf32>
    %c0_11 = arith.constant 0 : index
    %c0_12 = arith.constant 0 : index
    %22 = vector.load %arg5[%c0_11, %c0_12] : memref<128x128xf32, #tpu.memory_space<vmem>>, vector<128x128xf32>
    tpu.vector_store %arg5[%c0_11, %c0_12], %19 {strides = array<i32>} : memref<128x128xf32, #tpu.memory_space<vmem>>, vector<128x128xf32>,
    %c0_13 = arith.constant 0 : index
    %c0_14 = arith.constant 0 : index
    %23 = vector.load %arg6[%c0_13, %c0_14] : memref<128x128xf32, #tpu.memory_space<vmem>>, vector<128x128xf32>
    tpu.vector_store %arg6[%c0_13, %c0_14], %21 {strides = array<i32>} : memref<128x128xf32, #tpu.memory_space<vmem>>, vector<128x128xf32>,
    return
  }
  func.func @transform_0(%arg0: i32) -> (i32, i32) {
    %c0_i32 = arith.constant 0 : i32
    %c0_i32_0 = arith.constant 0 : i32
    return %arg0, %c0_i32 : i32, i32
  }
  func.func @transform_1(%arg0: i32) -> (i32, i32) {
    %c0_i32 = arith.constant 0 : i32
    %c0_i32_0 = arith.constant 0 : i32
    return %arg0, %c0_i32 : i32, i32
  }
  func.func @transform_2(%arg0: i32) -> (i32, i32) {
    %c0_i32 = arith.constant 0 : i32
    %c0_i32_0 = arith.constant 0 : i32
    %c0_i32_1 = arith.constant 0 : i32
    return %c0_i32, %c0_i32_0 : i32, i32
  }
  func.func @transform_3(%arg0: i32) -> (i32, i32) {
    %c0_i32 = arith.constant 0 : i32
    %c0_i32_0 = arith.constant 0 : i32
    %c0_i32_1 = arith.constant 0 : i32
    return %c0_i32, %c0_i32_0 : i32, i32
  }
  func.func @transform_4(%arg0: i32) -> (i32, i32) {
    %c0_i32 = arith.constant 0 : i32
    %c0_i32_0 = arith.constant 0 : i32
    return %arg0, %c0_i32 : i32, i32
  }
  func.func @transform_5(%arg0: i32) -> (i32, i32) {
    %c0_i32 = arith.constant 0 : i32
    %c0_i32_0 = arith.constant 0 : i32
    return %arg0, %c0_i32 : i32, i32
  }
}

</mosaic_0001>

<llo_original>
// kernel: tpu_custom_call.1
$region0: #{tpu_custom_call.1}
  #allocation0 [shape = 'u32[]', space=smem, size = 0x4, offset = 0x4, fixed_abs, tag = 'smem constant byte address 0x4 - core index']
  #allocation1 [shape = 'u32[72,128]{1,0:T(1,128)}', space=vmem, size = 0x9000, scoped, tag = 'internal scratch']
  %s0 = inlined_call_operand.vmem [shape: f32[384,32], index: 0, kind: input, shape index: {}]
  %s1 = inlined_call_operand.vmem [shape: f32[384,1], index: 1, kind: input, shape index: {}]
  %s2 = inlined_call_operand.vmem [shape: f32[384,32], index: 2, kind: input, shape index: {}]
  %s3 = inlined_call_operand.vmem [shape: f32[1,384], index: 3, kind: input, shape index: {}]
  %s4 = inlined_call_operand.hbm [shape: f32[384,128], index: 4, kind: output, shape index: {0}]
  %s5 = inlined_call_operand.hbm [shape: f32[384,128], index: 5, kind: output, shape index: {1}]
  %6 = xla_tuple %s4, %s5
  %s7 = sld [smem:[#allocation0]]
  $region57: #{tpu_custom_call.1} parent=0
    _
  %s9 = ssub.s32 1, %s7
  %s10 = scalar_select 0, %s9, %s7
  $region1: #{tpu_custom_call.1} parent=0
    #allocation2 [shape = 'u8[131072]{0}', space=vmem, size = 0x20000, scoped, tag = 'output window, operand 0']
    #allocation3 [shape = 's32[2]{0}', space=sflag, size = 0x8, scoped, tag = 'scoped memory for tpu_custom_call.1']
    #allocation4 [shape = 'u8[131072]{0}', space=vmem, size = 0x20000, scoped, tag = 'output window, operand 1']
    #allocation5 [shape = 's32[2]{0}', space=sflag, size = 0x8, scoped, tag = 'scoped memory for tpu_custom_call.1']
    %11 = vsyncpa [#allocation3], 0
    %s12 = scalar_lea.sflag [#allocation3], 1
    %13 = vsyncpa %s12, 0
    %14 = vsyncpa [#allocation5], 0
    %s15 = scalar_lea.sflag [#allocation5], 1
    %16 = vsyncpa %s15, 0
    loop: start=0, step=1, limit=5
    $region2: #{tpu_custom_call.1} parent=1 // loop_pre_header
      _
    $region3: #{tpu_custom_call.1} parent=1 // loop_header
      %s18 = sphi 0, %s22
      %p19 = scmp.ge.s32.totalorder %s18, 5
      %s28 = sphi 0, %s30
      %s31 = sphi 0, %s28
      %s32 = sphi 0, %s31
      %s48 = sphi 0, %s32
      %s54 = sphi 0, %s56
      %s57 = sphi 0, %s54
      %s58 = sphi 0, %s57
      %s74 = sphi 0, %s58
      %s78 = sphi 0, %s78
      %s80 = sphi 0, %s78
      %s81 = sphi 0, %s80
      %s95 = sphi 0, %s81
      %s99 = sphi 0, %s99
      %s101 = sphi 0, %s99
      %s102 = sphi 0, %s101
      %s116 = sphi 0, %s102
      %s122 = sphi 0, %s124
      %s125 = sphi 0, %s122
      %s126 = sphi 0, %s125
      %s142 = sphi 0, %s126
      %s148 = sphi 0, %s150
      %s151 = sphi 0, %s148
      %s152 = sphi 0, %s151
      %s168 = sphi 0, %s152
    $region4: #{tpu_custom_call.1} parent=1 // loop_header_branch
      %21 = sbr.rel (%p19) target = $region8
    $region5: #{tpu_custom_call.1} parent=1 // loop_body
      %s23 = ssub.s32 %s18, 1
      %s24 = ssub.s32 %s18, 2
      %s25 = sadd.s32 %s18, 1
      %s26 = ssub.s32 %s18, %s25
      %p27 = scmp.eq.s32.totalorder %s26, 0
      %s29 = sadd.s32 %s28, 1
      %s30 = scalar_select %p27, %s28, %s29
      %p33 = pneg %p27
      %p34 = scmp.eq.s32.totalorder %s18, 2
      %p35 = por %p33, %p34
      %p36 = scmp.ne.s32.totalorder %s28, %s31
      %p37 = scmp.eq.s32.totalorder %s18, 0
      %p38 = por %p36, %p37
      %p39 = scmp.ne.s32.totalorder %s28, %s31
      %p40 = scmp.eq.s32.totalorder %s23, 2
      %p41 = por %p39, %p40
      %p42 = scmp.ne.s32.totalorder %s31, %s32
      %p43 = scmp.eq.s32.totalorder %s23, 0
      %p44 = por %p42, %p43
      %p45 = scmp.ne.s32.totalorder %s31, %s32
      %p46 = scmp.eq.s32.totalorder %s24, 2
      %p47 = por %p45, %p46
      %p49 = scmp.ne.s32.totalorder %s32, %s48
      %p50 = scmp.eq.s32.totalorder %s24, 0
      %p51 = por %p49, %p50
      %s52 = ssub.s32 %s18, %s25
      %p53 = scmp.eq.s32.totalorder %s52, 0
      %s55 = sadd.s32 %s54, 1
      %s56 = scalar_select %p53, %s54, %s55
      %p59 = pneg %p53
      %p60 = scmp.eq.s32.totalorder %s18, 2
      %p61 = por %p59, %p60
      %p62 = scmp.ne.s32.totalorder %s54, %s57
      %p63 = scmp.eq.s32.totalorder %s18, 0
      %p64 = por %p62, %p63
      %p65 = scmp.ne.s32.totalorder %s54, %s57
      %p66 = scmp.eq.s32.totalorder %s23, 2
      %p67 = por %p65, %p66
      %p68 = scmp.ne.s32.totalorder %s57, %s58
      %p69 = scmp.eq.s32.totalorder %s23, 0
      %p70 = por %p68, %p69
      %p71 = scmp.ne.s32.totalorder %s57, %s58
      %p72 = scmp.eq.s32.totalorder %s24, 2
      %p73 = por %p71, %p72
      %p75 = scmp.ne.s32.totalorder %s58, %s74
      %p76 = scmp.eq.s32.totalorder %s24, 0
      %p77 = por %p75, %p76
      %s79 = sadd.s32 %s78, 1
      %p82 = scmp.eq.s32.totalorder %s18, 2
      %p83 = scmp.ne.s32.totalorder %s78, %s80
      %p84 = scmp.eq.s32.totalorder %s18, 0
      %p85 = por %p83, %p84
      %p86 = scmp.ne.s32.totalorder %s78, %s80
      %p87 = scmp.eq.s32.totalorder %s23, 2
      %p88 = por %p86, %p87
      %p89 = scmp.ne.s32.totalorder %s80, %s81
      %p90 = scmp.eq.s32.totalorder %s23, 0
      %p91 = por %p89, %p90
      %p92 = scmp.ne.s32.totalorder %s80, %s81
      %p93 = scmp.eq.s32.totalorder %s24, 2
      %p94 = por %p92, %p93
      %p96 = scmp.ne.s32.totalorder %s81, %s95
      %p97 = scmp.eq.s32.totalorder %s24, 0
      %p98 = por %p96, %p97
      %s100 = sadd.s32 %s99, 1
      %p103 = scmp.eq.s32.totalorder %s18, 2
      %p104 = scmp.ne.s32.totalorder %s99, %s101
      %p105 = scmp.eq.s32.totalorder %s18, 0
      %p106 = por %p104, %p105
      %p107 = scmp.ne.s32.totalorder %s99, %s101
      %p108 = scmp.eq.s32.totalorder %s23, 2
      %p109 = por %p107, %p108
      %p110 = scmp.ne.s32.totalorder %s101, %s102
      %p111 = scmp.eq.s32.totalorder %s23, 0
      %p112 = por %p110, %p111
      %p113 = scmp.ne.s32.totalorder %s101, %s102
      %p114 = scmp.eq.s32.totalorder %s24, 2
      %p115 = por %p113, %p114
      %p117 = scmp.ne.s32.totalorder %s102, %s116
      %p118 = scmp.eq.s32.totalorder %s24, 0
      %p119 = por %p117, %p118
      %s120 = ssub.s32 %s18, %s25
      %p121 = scmp.eq.s32.totalorder %s120, 0
      %s123 = sadd.s32 %s122, 1
      %s124 = scalar_select %p121, %s122, %s123
      %p127 = pneg %p121
      %p128 = scmp.eq.s32.totalorder %s18, 2
      %p129 = por %p127, %p128
      %p130 = scmp.ne.s32.totalorder %s122, %s125
      %p131 = scmp.eq.s32.totalorder %s18, 0
      %p132 = por %p130, %p131
      %p133 = scmp.ne.s32.totalorder %s122, %s125
      %p134 = scmp.eq.s32.totalorder %s23, 2
      %p135 = por %p133, %p134
      %p136 = scmp.ne.s32.totalorder %s125, %s126
      %p137 = scmp.eq.s32.totalorder %s23, 0
      %p138 = por %p136, %p137
      %p139 = scmp.ne.s32.totalorder %s125, %s126
      %p140 = scmp.eq.s32.totalorder %s24, 2
      %p141 = por %p139, %p140
      %p143 = scmp.ne.s32.totalorder %s126, %s142
      %p144 = scmp.eq.s32.totalorder %s24, 0
      %p145 = por %p143, %p144
      %s146 = ssub.s32 %s18, %s25
      %p147 = scmp.eq.s32.totalorder %s146, 0
      %s149 = sadd.s32 %s148, 1
      %s150 = scalar_select %p147, %s148, %s149
      %p153 = pneg %p147
      %p154 = scmp.eq.s32.totalorder %s18, 2
      %p155 = por %p153, %p154
      %p156 = scmp.ne.s32.totalorder %s148, %s151
      %p157 = scmp.eq.s32.totalorder %s18, 0
      %p158 = por %p156, %p157
      %p159 = scmp.ne.s32.totalorder %s148, %s151
      %p160 = scmp.eq.s32.totalorder %s23, 2
      %p161 = por %p159, %p160
      %p162 = scmp.ne.s32.totalorder %s151, %s152
      %p163 = scmp.eq.s32.totalorder %s23, 0
      %p164 = por %p162, %p163
      %p165 = scmp.ne.s32.totalorder %s151, %s152
      %p166 = scmp.eq.s32.totalorder %s24, 2
      %p167 = por %p165, %p166
      %p169 = scmp.ne.s32.totalorder %s152, %s168
      %p170 = scmp.eq.s32.totalorder %s24, 0
      %p171 = por %p169, %p170
      %p172 = scmp.le.s32.totalorder 1, %s18
      %p173 = scmp.lt.s32.totalorder %s18, 4
      %p174 = pnand %p172, %p173
      %p175 = pneg %p174
      // Predicated region
      $region9: #{tpu_custom_call.1} parent=5 // pred_check
        _
      $region10: #{tpu_custom_call.1} parent=5 // pred_check_branch
        %177 = sbr.rel (%p174) target = $region12
      $region11: #{tpu_custom_call.1} parent=5 // pred_region
        %s178 = ssub.s32 %s18, 1
        // Predicated region
        $region13: #{tpu_custom_call.1} parent=11 // pred_check
          %p179 = pneg %p91
        $region14: #{tpu_custom_call.1} parent=11 // pred_check_branch
          %181 = sbr.rel (%p179) target = $region16
        $region15: #{tpu_custom_call.1} parent=11 // pred_region
          _
        $region16: #{tpu_custom_call.1} parent=11 // pred_fallthru
          _
        // Predicated region
        $region17: #{tpu_custom_call.1} parent=11 // pred_check
          %p182 = pneg %p112
        $region18: #{tpu_custom_call.1} parent=11 // pred_check_branch
          %184 = sbr.rel (%p182) target = $region20
        $region19: #{tpu_custom_call.1} parent=11 // pred_region
          _
        $region20: #{tpu_custom_call.1} parent=11 // pred_fallthru
          _
      $region12: #{tpu_custom_call.1} parent=5 // pred_fallthru
        _
      %p185 = scmp.lt.s32.totalorder %s18, 3
      // Predicated region
      $region21: #{tpu_custom_call.1} parent=5 // pred_check
        %p186 = pneg %p185
      $region22: #{tpu_custom_call.1} parent=5 // pred_check_branch
        %188 = sbr.rel (%p186) target = $region24
      $region23: #{tpu_custom_call.1} parent=5 // pred_region
        // Predicated region
        $region25: #{tpu_custom_call.1} parent=23 // pred_check
          %p189 = pneg %p38
        $region26: #{tpu_custom_call.1} parent=23 // pred_check_branch
          %191 = sbr.rel (%p189) target = $region28
        $region27: #{tpu_custom_call.1} parent=23 // pred_region
          %s192 = smul.u32 16, %s18
          %p193 = scmp.lt.s32.totalorder %s192, 47
          %s194 = scalar_select %p193, %s192, 47
          %s195 = smul.addr %s194, 8
          %s196 = scalar_lea.vmem %s0, %s195
          %s197 = smul.u32 16, %s18
        $region28: #{tpu_custom_call.1} parent=23 // pred_fallthru
          _
        // Predicated region
        $region29: #{tpu_custom_call.1} parent=23 // pred_check
          %p198 = pneg %p64
        $region30: #{tpu_custom_call.1} parent=23 // pred_check_branch
          %200 = sbr.rel (%p198) target = $region32
        $region31: #{tpu_custom_call.1} parent=23 // pred_region
          %s201 = smul.u32 16, %s18
          %p202 = scmp.lt.s32.totalorder %s201, 47
          %s203 = scalar_select %p202, %s201, 47
          %s204 = smul.addr %s203, 8
          %s205 = scalar_lea.vmem %s1, %s204
          %s206 = smul.u32 16, %s18
        $region32: #{tpu_custom_call.1} parent=23 // pred_fallthru
          _
      $region24: #{tpu_custom_call.1} parent=5 // pred_fallthru
        _
      %p207 = scmp.le.s32.totalorder 1, %s18
      %p208 = scmp.lt.s32.totalorder %s18, 4
      %p209 = pnand %p207, %p208
      %p210 = pneg %p209
      // Predicated region
      $region33: #{tpu_custom_call.1} parent=5 // pred_check
        _
      $region34: #{tpu_custom_call.1} parent=5 // pred_check_branch
        %212 = sbr.rel (%p209) target = $region36
      $region35: #{tpu_custom_call.1} parent=5 // pred_region
        %s213 = ssub.s32 %s18, 1
        %s214 = smul.u32 16, %s23
        %p215 = scmp.lt.s32.totalorder %s214, 47
        %s216 = scalar_select %p215, %s214, 47
        %s217 = smul.addr %s216, 8
        %s218 = scalar_lea.vmem %s0, %s217
        %p219 = pneg %p44
        %p220 = pneg %p41
        %s221 = smul.u32 16, %s23
        %p222 = scmp.lt.s32.totalorder %s221, 47
        %s223 = scalar_select %p222, %s221, 47
        %s224 = smul.addr %s223, 8
        %s225 = scalar_lea.vmem %s1, %s224
        %p226 = pneg %p70
        %p227 = pneg %p67
        %p228 = pneg %p91
        %p229 = pneg %p88
        %p230 = pneg %p112
        %p231 = pneg %p109
        %p232 = pneg %p138
        %p233 = pneg %p135
        %s234 = sand.u32 %s125, 1
        %s235 = scalar_lea.sflag [#allocation3], %s234
        %s236 = sand.u32 %s125, 1
        %s237 = smul.addr %s236, 128
        %s238 = scalar_lea.vmem [#allocation2], %s237
        %p239 = pneg %p164
        %p240 = pneg %p161
        %s241 = sand.u32 %s151, 1
        %s242 = scalar_lea.sflag [#allocation5], %s241
        %s243 = sand.u32 %s151, 1
        %s244 = smul.addr %s243, 128
        %s245 = scalar_lea.vmem [#allocation4], %s244
        %s246 = smul.u32 16, %s23
        %p247 = scmp.lt.s32.totalorder %s246, 47
        %s248 = scalar_select %p247, %s246, 47
        %s249 = smul.addr %s248, 8
        %s250 = scalar_lea.vmem %s0, %s249
        %s251 = smul.u32 16, %s23
        %s252 = smul.u32 16, %s23
        %p253 = scmp.lt.s32.totalorder %s252, 47
        %s254 = scalar_select %p253, %s252, 47
        %s255 = smul.addr %s254, 8
        %s256 = scalar_lea.vmem %s1, %s255
        %s257 = smul.u32 16, %s23
        %s258 = smul.u32 16, %s23
        %s259 = smul.u32 16, %s23
        %v260 = vld [vmem:[%s250] sm:$0xff]
        %v261 = vld [vmem:[%s250 + $0x8] sm:$0xff]
        %v262 = vld [vmem:[%s250 + $0x10] sm:$0xff]
        %v263 = vld [vmem:[%s250 + $0x18] sm:$0xff]
        %v264 = vld [vmem:[%s250 + $0x20] sm:$0xff]
        %v265 = vld [vmem:[%s250 + $0x28] sm:$0xff]
        %v266 = vld [vmem:[%s250 + $0x30] sm:$0xff]
        %v267 = vld [vmem:[%s250 + $0x38] sm:$0xff]
        %v268 = vld [vmem:[%s250 + $0x40] sm:$0xff]
        %v269 = vld [vmem:[%s250 + $0x48] sm:$0xff]
        %v270 = vld [vmem:[%s250 + $0x50] sm:$0xff]
        %v271 = vld [vmem:[%s250 + $0x58] sm:$0xff]
        %v272 = vld [vmem:[%s250 + $0x60] sm:$0xff]
        %v273 = vld [vmem:[%s250 + $0x68] sm:$0xff]
        %v274 = vld [vmem:[%s250 + $0x70] sm:$0xff]
        %v275 = vld [vmem:[%s250 + $0x78] sm:$0xff]
        %v276 = vld [vmem:[%s2] sm:$0xff]
        %v277 = vld [vmem:[%s2 + $0x8] sm:$0xff]
        %v278 = vld [vmem:[%s2 + $0x10] sm:$0xff]
        %v279 = vld [vmem:[%s2 + $0x18] sm:$0xff]
        %v280 = vld [vmem:[%s2 + $0x20] sm:$0xff]
        %v281 = vld [vmem:[%s2 + $0x28] sm:$0xff]
        %v282 = vld [vmem:[%s2 + $0x30] sm:$0xff]
        %v283 = vld [vmem:[%s2 + $0x38] sm:$0xff]
        %v284 = vld [vmem:[%s2 + $0x40] sm:$0xff]
        %v285 = vld [vmem:[%s2 + $0x48] sm:$0xff]
        %v286 = vld [vmem:[%s2 + $0x50] sm:$0xff]
        %v287 = vld [vmem:[%s2 + $0x58] sm:$0xff]
        %v288 = vld [vmem:[%s2 + $0x60] sm:$0xff]
        %v289 = vld [vmem:[%s2 + $0x68] sm:$0xff]
        %v290 = vld [vmem:[%s2 + $0x70] sm:$0xff]
        %v291 = vld [vmem:[%s2 + $0x78] sm:$0xff]
        %v292 = vld [vmem:[%s2 + $0x80] sm:$0xff]
        %v293 = vld [vmem:[%s2 + $0x88] sm:$0xff]
        %v294 = vld [vmem:[%s2 + $0x90] sm:$0xff]
        %v295 = vld [vmem:[%s2 + $0x98] sm:$0xff]
        %v296 = vld [vmem:[%s2 + $0xa0] sm:$0xff]
        %v297 = vld [vmem:[%s2 + $0xa8] sm:$0xff]
        %v298 = vld [vmem:[%s2 + $0xb0] sm:$0xff]
        %v299 = vld [vmem:[%s2 + $0xb8] sm:$0xff]
        %v300 = vld [vmem:[%s2 + $0xc0] sm:$0xff]
        %v301 = vld [vmem:[%s2 + $0xc8] sm:$0xff]
        %v302 = vld [vmem:[%s2 + $0xd0] sm:$0xff]
        %v303 = vld [vmem:[%s2 + $0xd8] sm:$0xff]
        %v304 = vld [vmem:[%s2 + $0xe0] sm:$0xff]
        %v305 = vld [vmem:[%s2 + $0xe8] sm:$0xff]
        %v306 = vld [vmem:[%s2 + $0xf0] sm:$0xff]
        %v307 = vld [vmem:[%s2 + $0xf8] sm:$0xff]
        %v308 = vld [vmem:[%s2 + $0x100] sm:$0xff]
        %v309 = vld [vmem:[%s2 + $0x108] sm:$0xff]
        %v310 = vld [vmem:[%s2 + $0x110] sm:$0xff]
        %v311 = vld [vmem:[%s2 + $0x118] sm:$0xff]
        %v312 = vld [vmem:[%s2 + $0x120] sm:$0xff]
        %v313 = vld [vmem:[%s2 + $0x128] sm:$0xff]
        %v314 = vld [vmem:[%s2 + $0x130] sm:$0xff]
        %v315 = vld [vmem:[%s2 + $0x138] sm:$0xff]
        %v316 = vld [vmem:[%s2 + $0x140] sm:$0xff]
        %v317 = vld [vmem:[%s2 + $0x148] sm:$0xff]
        %v318 = vld [vmem:[%s2 + $0x150] sm:$0xff]
        %v319 = vld [vmem:[%s2 + $0x158] sm:$0xff]
        %v320 = vld [vmem:[%s2 + $0x160] sm:$0xff]
        %v321 = vld [vmem:[%s2 + $0x168] sm:$0xff]
        %v322 = vld [vmem:[%s2 + $0x170] sm:$0xff]
        %v323 = vld [vmem:[%s2 + $0x178] sm:$0xff]
        %vm324 = vcmask 261120
        %v326 = vsel %vm324, %v260, 0
        %v329 = vsel %vm324, %v261, 0
        %v332 = vsel %vm324, %v262, 0
        %v335 = vsel %vm324, %v263, 0
        %v338 = vsel %vm324, %v264, 0
        %v341 = vsel %vm324, %v265, 0
        %v344 = vsel %vm324, %v266, 0
        %v347 = vsel %vm324, %v267, 0
        %v350 = vsel %vm324, %v268, 0
        %v353 = vsel %vm324, %v269, 0
        %v356 = vsel %vm324, %v270, 0
        %v359 = vsel %vm324, %v271, 0
        %v362 = vsel %vm324, %v272, 0
        %v365 = vsel %vm324, %v273, 0
        %v368 = vsel %vm324, %v274, 0
        %v371 = vsel %vm324, %v275, 0
        %v374 = vsel %vm324, %v276, 0
        %v377 = vsel %vm324, %v277, 0
        %v380 = vsel %vm324, %v278, 0
        %v383 = vsel %vm324, %v279, 0
        %v386 = vsel %vm324, %v280, 0
        %v389 = vsel %vm324, %v281, 0
        %v392 = vsel %vm324, %v282, 0
        %v395 = vsel %vm324, %v283, 0
        %v398 = vsel %vm324, %v284, 0
        %v401 = vsel %vm324, %v285, 0
        %v404 = vsel %vm324, %v286, 0
        %v407 = vsel %vm324, %v287, 0
        %v410 = vsel %vm324, %v288, 0
        %v413 = vsel %vm324, %v289, 0
        %v416 = vsel %vm324, %v290, 0
        %v419 = vsel %vm324, %v291, 0
        %v422 = vsel %vm324, %v292, 0
        %v425 = vsel %vm324, %v293, 0
        %v428 = vsel %vm324, %v294, 0
        %v431 = vsel %vm324, %v295, 0
        %v434 = vsel %vm324, %v296, 0
        %v437 = vsel %vm324, %v297, 0
        %v440 = vsel %vm324, %v298, 0
        %v443 = vsel %vm324, %v299, 0
        %v446 = vsel %vm324, %v300, 0
        %v449 = vsel %vm324, %v301, 0
        %v452 = vsel %vm324, %v302, 0
        %v455 = vsel %vm324, %v303, 0
        %v458 = vsel %vm324, %v304, 0
        %v461 = vsel %vm324, %v305, 0
        %v464 = vsel %vm324, %v306, 0
        %v467 = vsel %vm324, %v307, 0
        %v470 = vsel %vm324, %v308, 0
        %v473 = vsel %vm324, %v309, 0
        %v476 = vsel %vm324, %v310, 0
        %v479 = vsel %vm324, %v311, 0
        %v482 = vsel %vm324, %v312, 0
        %v485 = vsel %vm324, %v313, 0
        %v488 = vsel %vm324, %v314, 0
        %v491 = vsel %vm324, %v315, 0
        %v494 = vsel %vm324, %v316, 0
        %v497 = vsel %vm324, %v317, 0
        %v500 = vsel %vm324, %v318, 0
        %v503 = vsel %vm324, %v319, 0
        %v506 = vsel %vm324, %v320, 0
        %v509 = vsel %vm324, %v321, 0
        %v512 = vsel %vm324, %v322, 0
        %v515 = vsel %vm324, %v323, 0
        %517 = vmatpush.xpose.msra.mxu0 %v419
        %518 = vmatpush.xpose.msra.mxu0 %v416
        %519 = vmatpush.xpose.msra.mxu0 %v413
        %520 = vmatpush.xpose.msra.mxu0 %v410
        %521 = vmatpush.xpose.msra.mxu0 %v407
        %522 = vmatpush.xpose.msra.mxu0 %v404
        %523 = vmatpush.xpose.msra.mxu0 %v401
        %524 = vmatpush.xpose.msra.mxu0 %v398
        %525 = vmatpush.xpose.msra.mxu0 %v395
        %526 = vmatpush.xpose.msra.mxu0 %v392
        %527 = vmatpush.xpose.msra.mxu0 %v389
        %528 = vmatpush.xpose.msra.mxu0 %v386
        %529 = vmatpush.xpose.msra.mxu0 %v383
        %530 = vmatpush.xpose.msra.mxu0 %v380
        %531 = vmatpush.xpose.msra.mxu0 %v377
        %532 = vmatpush.xpose.msra.mxu0 %v374
        %533 = vmatmul.f32.gmra.mxu0 %v326
        %v534 = vpop.f32.mrf.mxu0
        %v535 = vadd.f32 0.0, %v534
        %536 = vmatmul.f32.gmra.mxu0 %v329
        %v537 = vpop.f32.mrf.mxu0
        %v538 = vadd.f32 0.0, %v537
        %539 = vmatmul.f32.gmra.mxu0 %v332
        %v540 = vpop.f32.mrf.mxu0
        %v541 = vadd.f32 0.0, %v540
        %542 = vmatmul.f32.gmra.mxu0 %v335
        %v543 = vpop.f32.mrf.mxu0
        %v544 = vadd.f32 0.0, %v543
        %545 = vmatmul.f32.gmra.mxu0 %v338
        %v546 = vpop.f32.mrf.mxu0
        %v547 = vadd.f32 0.0, %v546
        %548 = vmatmul.f32.gmra.mxu0 %v341
        %v549 = vpop.f32.mrf.mxu0
        %v550 = vadd.f32 0.0, %v549
        %551 = vmatmul.f32.gmra.mxu0 %v344
        %v552 = vpop.f32.mrf.mxu0
        %v553 = vadd.f32 0.0, %v552
        %554 = vmatmul.f32.gmra.mxu0 %v347
        %v555 = vpop.f32.mrf.mxu0
        %v556 = vadd.f32 0.0, %v555
        %557 = vmatmul.f32.gmra.mxu0 %v350
        %v558 = vpop.f32.mrf.mxu0
        %v559 = vadd.f32 0.0, %v558
        %560 = vmatmul.f32.gmra.mxu0 %v353
        %v561 = vpop.f32.mrf.mxu0
        %v562 = vadd.f32 0.0, %v561
        %563 = vmatmul.f32.gmra.mxu0 %v356
        %v564 = vpop.f32.mrf.mxu0
        %v565 = vadd.f32 0.0, %v564
        %566 = vmatmul.f32.gmra.mxu0 %v359
        %v567 = vpop.f32.mrf.mxu0
        %v568 = vadd.f32 0.0, %v567
        %569 = vmatmul.f32.gmra.mxu0 %v362
        %v570 = vpop.f32.mrf.mxu0
        %v571 = vadd.f32 0.0, %v570
        %572 = vmatmul.f32.gmra.mxu0 %v365
        %v573 = vpop.f32.mrf.mxu0
        %v574 = vadd.f32 0.0, %v573
        %575 = vmatmul.f32.gmra.mxu0 %v368
        %v576 = vpop.f32.mrf.mxu0
        %v577 = vadd.f32 0.0, %v576
        %578 = vmatmul.f32.gmra.mxu0 %v371
        %v579 = vpop.f32.mrf.mxu0
        %v580 = vadd.f32 0.0, %v579
        %581 = vdwg.mxu0
        %582 = vmatpush.xpose.msra.mxu0 %v467
        %583 = vmatpush.xpose.msra.mxu0 %v464
        %584 = vmatpush.xpose.msra.mxu0 %v461
        %585 = vmatpush.xpose.msra.mxu0 %v458
        %586 = vmatpush.xpose.msra.mxu0 %v455
        %587 = vmatpush.xpose.msra.mxu0 %v452
        %588 = vmatpush.xpose.msra.mxu0 %v449
        %589 = vmatpush.xpose.msra.mxu0 %v446
        %590 = vmatpush.xpose.msra.mxu0 %v443
        %591 = vmatpush.xpose.msra.mxu0 %v440
        %592 = vmatpush.xpose.msra.mxu0 %v437
        %593 = vmatpush.xpose.msra.mxu0 %v434
        %594 = vmatpush.xpose.msra.mxu0 %v431
        %595 = vmatpush.xpose.msra.mxu0 %v428
        %596 = vmatpush.xpose.msra.mxu0 %v425
        %597 = vmatpush.xpose.msra.mxu0 %v422
        %598 = vmatmul.f32.gmra.mxu0 %v326
        %v599 = vpop.f32.mrf.mxu0
        %v600 = vadd.f32 0.0, %v599
        %601 = vmatmul.f32.gmra.mxu0 %v329
        %v602 = vpop.f32.mrf.mxu0
        %v603 = vadd.f32 0.0, %v602
        %604 = vmatmul.f32.gmra.mxu0 %v332
        %v605 = vpop.f32.mrf.mxu0
        %v606 = vadd.f32 0.0, %v605
        %607 = vmatmul.f32.gmra.mxu0 %v335
        %v608 = vpop.f32.mrf.mxu0
        %v609 = vadd.f32 0.0, %v608
        %610 = vmatmul.f32.gmra.mxu0 %v338
        %v611 = vpop.f32.mrf.mxu0
        %v612 = vadd.f32 0.0, %v611
        %613 = vmatmul.f32.gmra.mxu0 %v341
        %v614 = vpop.f32.mrf.mxu0
        %v615 = vadd.f32 0.0, %v614
        %616 = vmatmul.f32.gmra.mxu0 %v344
        %v617 = vpop.f32.mrf.mxu0
        %v618 = vadd.f32 0.0, %v617
        %619 = vmatmul.f32.gmra.mxu0 %v347
        %v620 = vpop.f32.mrf.mxu0
        %v621 = vadd.f32 0.0, %v620
        %622 = vmatmul.f32.gmra.mxu0 %v350
        %v623 = vpop.f32.mrf.mxu0
        %v624 = vadd.f32 0.0, %v623
        %625 = vmatmul.f32.gmra.mxu0 %v353
        %v626 = vpop.f32.mrf.mxu0
        %v627 = vadd.f32 0.0, %v626
        %628 = vmatmul.f32.gmra.mxu0 %v356
        %v629 = vpop.f32.mrf.mxu0
        %v630 = vadd.f32 0.0, %v629
        %631 = vmatmul.f32.gmra.mxu0 %v359
        %v632 = vpop.f32.mrf.mxu0
        %v633 = vadd.f32 0.0, %v632
        %634 = vmatmul.f32.gmra.mxu0 %v362
        %v635 = vpop.f32.mrf.mxu0
        %v636 = vadd.f32 0.0, %v635
        %637 = vmatmul.f32.gmra.mxu0 %v365
        %v638 = vpop.f32.mrf.mxu0
        %v639 = vadd.f32 0.0, %v638
        %640 = vmatmul.f32.gmra.mxu0 %v368
        %v641 = vpop.f32.mrf.mxu0
        %v642 = vadd.f32 0.0, %v641
        %643 = vmatmul.f32.gmra.mxu0 %v371
        %v644 = vpop.f32.mrf.mxu0
        %v645 = vadd.f32 0.0, %v644
        %646 = vdwg.mxu0
        %647 = vmatpush.xpose.msra.mxu0 %v515
        %648 = vmatpush.xpose.msra.mxu0 %v512
        %649 = vmatpush.xpose.msra.mxu0 %v509
        %650 = vmatpush.xpose.msra.mxu0 %v506
        %651 = vmatpush.xpose.msra.mxu0 %v503
        %652 = vmatpush.xpose.msra.mxu0 %v500
        %653 = vmatpush.xpose.msra.mxu0 %v497
        %654 = vmatpush.xpose.msra.mxu0 %v494
        %655 = vmatpush.xpose.msra.mxu0 %v491
        %656 = vmatpush.xpose.msra.mxu0 %v488
        %657 = vmatpush.xpose.msra.mxu0 %v485
        %658 = vmatpush.xpose.msra.mxu0 %v482
        %659 = vmatpush.xpose.msra.mxu0 %v479
        %660 = vmatpush.xpose.msra.mxu0 %v476
        %661 = vmatpush.xpose.msra.mxu0 %v473
        %662 = vmatpush.xpose.msra.mxu0 %v470
        %663 = vmatmul.f32.gmra.mxu0 %v326
        %v664 = vpop.f32.mrf.mxu0
        %v665 = vadd.f32 0.0, %v664
        %666 = vmatmul.f32.gmra.mxu0 %v329
        %v667 = vpop.f32.mrf.mxu0
        %v668 = vadd.f32 0.0, %v667
        %669 = vmatmul.f32.gmra.mxu0 %v332
        %v670 = vpop.f32.mrf.mxu0
        %v671 = vadd.f32 0.0, %v670
        %672 = vmatmul.f32.gmra.mxu0 %v335
        %v673 = vpop.f32.mrf.mxu0
        %v674 = vadd.f32 0.0, %v673
        %675 = vmatmul.f32.gmra.mxu0 %v338
        %v676 = vpop.f32.mrf.mxu0
        %v677 = vadd.f32 0.0, %v676
        %678 = vmatmul.f32.gmra.mxu0 %v341
        %v679 = vpop.f32.mrf.mxu0
        %v680 = vadd.f32 0.0, %v679
        %681 = vmatmul.f32.gmra.mxu0 %v344
        %v682 = vpop.f32.mrf.mxu0
        %v683 = vadd.f32 0.0, %v682
        %684 = vmatmul.f32.gmra.mxu0 %v347
        %v685 = vpop.f32.mrf.mxu0
        %v686 = vadd.f32 0.0, %v685
        %687 = vmatmul.f32.gmra.mxu0 %v350
        %v688 = vpop.f32.mrf.mxu0
        %v689 = vadd.f32 0.0, %v688
        %690 = vmatmul.f32.gmra.mxu0 %v353
        %v691 = vpop.f32.mrf.mxu0
        %v692 = vadd.f32 0.0, %v691
        %693 = vmatmul.f32.gmra.mxu0 %v356
        %v694 = vpop.f32.mrf.mxu0
        %v695 = vadd.f32 0.0, %v694
        %696 = vmatmul.f32.gmra.mxu0 %v359
        %v697 = vpop.f32.mrf.mxu0
        %v698 = vadd.f32 0.0, %v697
        %699 = vmatmul.f32.gmra.mxu0 %v362
        %v700 = vpop.f32.mrf.mxu0
        %v701 = vadd.f32 0.0, %v700
        %702 = vmatmul.f32.gmra.mxu0 %v365
        %v703 = vpop.f32.mrf.mxu0
        %v704 = vadd.f32 0.0, %v703
        %705 = vmatmul.f32.gmra.mxu0 %v368
        %v706 = vpop.f32.mrf.mxu0
        %v707 = vadd.f32 0.0, %v706
        %708 = vmatmul.f32.gmra.mxu0 %v371
        %v709 = vpop.f32.mrf.mxu0
        %v710 = vadd.f32 0.0, %v709
        %711 = vdwg.mxu0
        %v712 = vld [vmem:[%s256] sm:$0xff]
        %v713 = vld [vmem:[%s256 + $0x8] sm:$0xff]
        %v714 = vld [vmem:[%s256 + $0x10] sm:$0xff]
        %v715 = vld [vmem:[%s256 + $0x18] sm:$0xff]
        %v716 = vld [vmem:[%s256 + $0x20] sm:$0xff]
        %v717 = vld [vmem:[%s256 + $0x28] sm:$0xff]
        %v718 = vld [vmem:[%s256 + $0x30] sm:$0xff]
        %v719 = vld [vmem:[%s256 + $0x38] sm:$0xff]
        %v720 = vld [vmem:[%s256 + $0x40] sm:$0xff]
        %v721 = vld [vmem:[%s256 + $0x48] sm:$0xff]
        %v722 = vld [vmem:[%s256 + $0x50] sm:$0xff]
        %v723 = vld [vmem:[%s256 + $0x58] sm:$0xff]
        %v724 = vld [vmem:[%s256 + $0x60] sm:$0xff]
        %v725 = vld [vmem:[%s256 + $0x68] sm:$0xff]
        %v726 = vld [vmem:[%s256 + $0x70] sm:$0xff]
        %v727 = vld [vmem:[%s256 + $0x78] sm:$0xff]
        %v728 = vld [vmem:[%s3] sm:$0x7]
        %730 = vset.pattern.permute.xlu0 0
        %731 = vperm.xlu0 %730, %v712
        %v732 = vpop.permute.xlu0 %731
        %735 = vset.pattern.permute.xlu0 0
        %736 = vperm.xlu0 %735, %v713
        %v737 = vpop.permute.xlu0 %736
        %740 = vset.pattern.permute.xlu0 0
        %741 = vperm.xlu0 %740, %v714
        %v742 = vpop.permute.xlu0 %741
        %745 = vset.pattern.permute.xlu0 0
        %746 = vperm.xlu0 %745, %v715
        %v747 = vpop.permute.xlu0 %746
        %750 = vset.pattern.permute.xlu0 0
        %751 = vperm.xlu0 %750, %v716
        %v752 = vpop.permute.xlu0 %751
        %755 = vset.pattern.permute.xlu0 0
        %756 = vperm.xlu0 %755, %v717
        %v757 = vpop.permute.xlu0 %756
        %760 = vset.pattern.permute.xlu0 0
        %761 = vperm.xlu0 %760, %v718
        %v762 = vpop.permute.xlu0 %761
        %765 = vset.pattern.permute.xlu0 0
        %766 = vperm.xlu0 %765, %v719
        %v767 = vpop.permute.xlu0 %766
        %770 = vset.pattern.permute.xlu0 0
        %771 = vperm.xlu0 %770, %v720
        %v772 = vpop.permute.xlu0 %771
        %775 = vset.pattern.permute.xlu0 0
        %776 = vperm.xlu0 %775, %v721
        %v777 = vpop.permute.xlu0 %776
        %780 = vset.pattern.permute.xlu0 0
        %781 = vperm.xlu0 %780, %v722
        %v782 = vpop.permute.xlu0 %781
        %785 = vset.pattern.permute.xlu0 0
        %786 = vperm.xlu0 %785, %v723
        %v787 = vpop.permute.xlu0 %786
        %790 = vset.pattern.permute.xlu0 0
        %791 = vperm.xlu0 %790, %v724
        %v792 = vpop.permute.xlu0 %791
        %795 = vset.pattern.permute.xlu0 0
        %796 = vperm.xlu0 %795, %v725
        %v797 = vpop.permute.xlu0 %796
        %800 = vset.pattern.permute.xlu0 0
        %801 = vperm.xlu0 %800, %v726
        %v802 = vpop.permute.xlu0 %801
        %805 = vset.pattern.permute.xlu0 0
        %806 = vperm.xlu0 %805, %v727
        %v807 = vpop.permute.xlu0 %806
        %v810 = vperm.slane %v728, 0
        %v811 = vperm.slane %v728, 1
        %v812 = vperm.slane %v728, 2
        %v816 = vadd.f32 %v732, %v810
        %v817 = vadd.f32 %v732, %v811
        %v818 = vadd.f32 %v732, %v812
        %v819 = vadd.f32 %v737, %v810
        %v820 = vadd.f32 %v737, %v811
        %v821 = vadd.f32 %v737, %v812
        %v822 = vadd.f32 %v742, %v810
        %v823 = vadd.f32 %v742, %v811
        %v824 = vadd.f32 %v742, %v812
        %v825 = vadd.f32 %v747, %v810
        %v826 = vadd.f32 %v747, %v811
        %v827 = vadd.f32 %v747, %v812
        %v828 = vadd.f32 %v752, %v810
        %v829 = vadd.f32 %v752, %v811
        %v830 = vadd.f32 %v752, %v812
        %v831 = vadd.f32 %v757, %v810
        %v832 = vadd.f32 %v757, %v811
        %v833 = vadd.f32 %v757, %v812
        %v834 = vadd.f32 %v762, %v810
        %v835 = vadd.f32 %v762, %v811
        %v836 = vadd.f32 %v762, %v812
        %v837 = vadd.f32 %v767, %v810
        %v838 = vadd.f32 %v767, %v811
        %v839 = vadd.f32 %v767, %v812
        %v840 = vadd.f32 %v772, %v810
        %v841 = vadd.f32 %v772, %v811
        %v842 = vadd.f32 %v772, %v812
        %v843 = vadd.f32 %v777, %v810
        %v844 = vadd.f32 %v777, %v811
        %v845 = vadd.f32 %v777, %v812
        %v846 = vadd.f32 %v782, %v810
        %v847 = vadd.f32 %v782, %v811
        %v848 = vadd.f32 %v782, %v812
        %v849 = vadd.f32 %v787, %v810
        %v850 = vadd.f32 %v787, %v811
        %v851 = vadd.f32 %v787, %v812
        %v852 = vadd.f32 %v792, %v810
        %v853 = vadd.f32 %v792, %v811
        %v854 = vadd.f32 %v792, %v812
        %v855 = vadd.f32 %v797, %v810
        %v856 = vadd.f32 %v797, %v811
        %v857 = vadd.f32 %v797, %v812
        %v858 = vadd.f32 %v802, %v810
        %v859 = vadd.f32 %v802, %v811
        %v860 = vadd.f32 %v802, %v812
        %v861 = vadd.f32 %v807, %v810
        %v862 = vadd.f32 %v807, %v811
        %v863 = vadd.f32 %v807, %v812
        %v864 = vmul.f32 %v535, 0.001953125
        %v865 = vmul.f32 %v600, 0.001953125
        %v866 = vmul.f32 %v665, 0.001953125
        %v867 = vmul.f32 %v538, 0.001953125
        %v868 = vmul.f32 %v603, 0.001953125
        %v869 = vmul.f32 %v668, 0.001953125
        %v870 = vmul.f32 %v541, 0.001953125
        %v871 = vmul.f32 %v606, 0.001953125
        %v872 = vmul.f32 %v671, 0.001953125
        %v873 = vmul.f32 %v544, 0.001953125
        %v874 = vmul.f32 %v609, 0.001953125
        %v875 = vmul.f32 %v674, 0.001953125
        %v876 = vmul.f32 %v547, 0.001953125
        %v877 = vmul.f32 %v612, 0.001953125
        %v878 = vmul.f32 %v677, 0.001953125
        %v879 = vmul.f32 %v550, 0.001953125
        %v880 = vmul.f32 %v615, 0.001953125
        %v881 = vmul.f32 %v680, 0.001953125
        %v882 = vmul.f32 %v553, 0.001953125
        %v883 = vmul.f32 %v618, 0.001953125
        %v884 = vmul.f32 %v683, 0.001953125
        %v885 = vmul.f32 %v556, 0.001953125
        %v886 = vmul.f32 %v621, 0.001953125
        %v887 = vmul.f32 %v686, 0.001953125
        %v888 = vmul.f32 %v559, 0.001953125
        %v889 = vmul.f32 %v624, 0.001953125
        %v890 = vmul.f32 %v689, 0.001953125
        %v891 = vmul.f32 %v562, 0.001953125
        %v892 = vmul.f32 %v627, 0.001953125
        %v893 = vmul.f32 %v692, 0.001953125
        %v894 = vmul.f32 %v565, 0.001953125
        %v895 = vmul.f32 %v630, 0.001953125
        %v896 = vmul.f32 %v695, 0.001953125
        %v897 = vmul.f32 %v568, 0.001953125
        %v898 = vmul.f32 %v633, 0.001953125
        %v899 = vmul.f32 %v698, 0.001953125
        %v900 = vmul.f32 %v571, 0.001953125
        %v901 = vmul.f32 %v636, 0.001953125
        %v902 = vmul.f32 %v701, 0.001953125
        %v903 = vmul.f32 %v574, 0.001953125
        %v904 = vmul.f32 %v639, 0.001953125
        %v905 = vmul.f32 %v704, 0.001953125
        %v906 = vmul.f32 %v577, 0.001953125
        %v907 = vmul.f32 %v642, 0.001953125
        %v908 = vmul.f32 %v707, 0.001953125
        %v909 = vmul.f32 %v580, 0.001953125
        %v910 = vmul.f32 %v645, 0.001953125
        %v911 = vmul.f32 %v710, 0.001953125
        %v912 = vadd.f32 %v816, %v864
        %v913 = vadd.f32 %v817, %v865
        %v914 = vadd.f32 %v818, %v866
        %v915 = vadd.f32 %v819, %v867
        %v916 = vadd.f32 %v820, %v868
        %v917 = vadd.f32 %v821, %v869
        %v918 = vadd.f32 %v822, %v870
        %v919 = vadd.f32 %v823, %v871
        %v920 = vadd.f32 %v824, %v872
        %v921 = vadd.f32 %v825, %v873
        %v922 = vadd.f32 %v826, %v874
        %v923 = vadd.f32 %v827, %v875
        %v924 = vadd.f32 %v828, %v876
        %v925 = vadd.f32 %v829, %v877
        %v926 = vadd.f32 %v830, %v878
        %v927 = vadd.f32 %v831, %v879
        %v928 = vadd.f32 %v832, %v880
        %v929 = vadd.f32 %v833, %v881
        %v930 = vadd.f32 %v834, %v882
        %v931 = vadd.f32 %v835, %v883
        %v932 = vadd.f32 %v836, %v884
        %v933 = vadd.f32 %v837, %v885
        %v934 = vadd.f32 %v838, %v886
        %v935 = vadd.f32 %v839, %v887
        %v936 = vadd.f32 %v840, %v888
        %v937 = vadd.f32 %v841, %v889
        %v938 = vadd.f32 %v842, %v890
        %v939 = vadd.f32 %v843, %v891
        %v940 = vadd.f32 %v844, %v892
        %v941 = vadd.f32 %v845, %v893
        %v942 = vadd.f32 %v846, %v894
        %v943 = vadd.f32 %v847, %v895
        %v944 = vadd.f32 %v848, %v896
        %v945 = vadd.f32 %v849, %v897
        %v946 = vadd.f32 %v850, %v898
        %v947 = vadd.f32 %v851, %v899
        %v948 = vadd.f32 %v852, %v900
        %v949 = vadd.f32 %v853, %v901
        %v950 = vadd.f32 %v854, %v902
        %v951 = vadd.f32 %v855, %v903
        %v952 = vadd.f32 %v856, %v904
        %v953 = vadd.f32 %v857, %v905
        %v954 = vadd.f32 %v858, %v906
        %v955 = vadd.f32 %v859, %v907
        %v956 = vadd.f32 %v860, %v908
        %v957 = vadd.f32 %v861, %v909
        %v958 = vadd.f32 %v862, %v910
        %v959 = vadd.f32 %v863, %v911
        %v960 = vmin.f32 %v912, 0.0
        %v961 = vmin.f32 %v913, 0.0
        %v962 = vmin.f32 %v914, 0.0
        %v963 = vmin.f32 %v915, 0.0
        %v964 = vmin.f32 %v916, 0.0
        %v965 = vmin.f32 %v917, 0.0
        %v966 = vmin.f32 %v918, 0.0
        %v967 = vmin.f32 %v919, 0.0
        %v968 = vmin.f32 %v920, 0.0
        %v969 = vmin.f32 %v921, 0.0
        %v970 = vmin.f32 %v922, 0.0
        %v971 = vmin.f32 %v923, 0.0
        %v972 = vmin.f32 %v924, 0.0
        %v973 = vmin.f32 %v925, 0.0
        %v974 = vmin.f32 %v926, 0.0
        %v975 = vmin.f32 %v927, 0.0
        %v976 = vmin.f32 %v928, 0.0
        %v977 = vmin.f32 %v929, 0.0
        %v978 = vmin.f32 %v930, 0.0
        %v979 = vmin.f32 %v931, 0.0
        %v980 = vmin.f32 %v932, 0.0
        %v981 = vmin.f32 %v933, 0.0
        %v982 = vmin.f32 %v934, 0.0
        %v983 = vmin.f32 %v935, 0.0
        %v984 = vmin.f32 %v936, 0.0
        %v985 = vmin.f32 %v937, 0.0
        %v986 = vmin.f32 %v938, 0.0
        %v987 = vmin.f32 %v939, 0.0
        %v988 = vmin.f32 %v940, 0.0
        %v989 = vmin.f32 %v941, 0.0
        %v990 = vmin.f32 %v942, 0.0
        %v991 = vmin.f32 %v943, 0.0
        %v992 = vmin.f32 %v944, 0.0
        %v993 = vmin.f32 %v945, 0.0
        %v994 = vmin.f32 %v946, 0.0
        %v995 = vmin.f32 %v947, 0.0
        %v996 = vmin.f32 %v948, 0.0
        %v997 = vmin.f32 %v949, 0.0
        %v998 = vmin.f32 %v950, 0.0
        %v999 = vmin.f32 %v951, 0.0
        %v1000 = vmin.f32 %v952, 0.0
        %v1001 = vmin.f32 %v953, 0.0
        %v1002 = vmin.f32 %v954, 0.0
        %v1003 = vmin.f32 %v955, 0.0
        %v1004 = vmin.f32 %v956, 0.0
        %v1005 = vmin.f32 %v957, 0.0
        %v1006 = vmin.f32 %v958, 0.0
        %v1007 = vmin.f32 %v959, 0.0
        %v1008 = vmul.f32 %v960, 1.442695
        %v1009 = vpow.pop %v1008
        %v1010 = vmul.f32 %v961, 1.442695
        %v1011 = vpow.pop %v1010
        %v1012 = vmul.f32 %v962, 1.442695
        %v1013 = vpow.pop %v1012
        %v1014 = vmul.f32 %v963, 1.442695
        %v1015 = vpow.pop %v1014
        %v1016 = vmul.f32 %v964, 1.442695
        %v1017 = vpow.pop %v1016
        %v1018 = vmul.f32 %v965, 1.442695
        %v1019 = vpow.pop %v1018
        %v1020 = vmul.f32 %v966, 1.442695
        %v1021 = vpow.pop %v1020
        %v1022 = vmul.f32 %v967, 1.442695
        %v1023 = vpow.pop %v1022
        %v1024 = vmul.f32 %v968, 1.442695
        %v1025 = vpow.pop %v1024
        %v1026 = vmul.f32 %v969, 1.442695
        %v1027 = vpow.pop %v1026
        %v1028 = vmul.f32 %v970, 1.442695
        %v1029 = vpow.pop %v1028
        %v1030 = vmul.f32 %v971, 1.442695
        %v1031 = vpow.pop %v1030
        %v1032 = vmul.f32 %v972, 1.442695
        %v1033 = vpow.pop %v1032
        %v1034 = vmul.f32 %v973, 1.442695
        %v1035 = vpow.pop %v1034
        %v1036 = vmul.f32 %v974, 1.442695
        %v1037 = vpow.pop %v1036
        %v1038 = vmul.f32 %v975, 1.442695
        %v1039 = vpow.pop %v1038
        %v1040 = vmul.f32 %v976, 1.442695
        %v1041 = vpow.pop %v1040
        %v1042 = vmul.f32 %v977, 1.442695
        %v1043 = vpow.pop %v1042
        %v1044 = vmul.f32 %v978, 1.442695
        %v1045 = vpow.pop %v1044
        %v1046 = vmul.f32 %v979, 1.442695
        %v1047 = vpow.pop %v1046
        %v1048 = vmul.f32 %v980, 1.442695
        %v1049 = vpow.pop %v1048
        %v1050 = vmul.f32 %v981, 1.442695
        %v1051 = vpow.pop %v1050
        %v1052 = vmul.f32 %v982, 1.442695
        %v1053 = vpow.pop %v1052
        %v1054 = vmul.f32 %v983, 1.442695
        %v1055 = vpow.pop %v1054
        %v1056 = vmul.f32 %v984, 1.442695
        %v1057 = vpow.pop %v1056
        %v1058 = vmul.f32 %v985, 1.442695
        %v1059 = vpow.pop %v1058
        %v1060 = vmul.f32 %v986, 1.442695
        %v1061 = vpow.pop %v1060
        %v1062 = vmul.f32 %v987, 1.442695
        %v1063 = vpow.pop %v1062
        %v1064 = vmul.f32 %v988, 1.442695
        %v1065 = vpow.pop %v1064
        %v1066 = vmul.f32 %v989, 1.442695
        %v1067 = vpow.pop %v1066
        %v1068 = vmul.f32 %v990, 1.442695
        %v1069 = vpow.pop %v1068
        %v1070 = vmul.f32 %v991, 1.442695
        %v1071 = vpow.pop %v1070
        %v1072 = vmul.f32 %v992, 1.442695
        %v1073 = vpow.pop %v1072
        %v1074 = vmul.f32 %v993, 1.442695
        %v1075 = vpow.pop %v1074
        %v1076 = vmul.f32 %v994, 1.442695
        %v1077 = vpow.pop %v1076
        %v1078 = vmul.f32 %v995, 1.442695
        %v1079 = vpow.pop %v1078
        %v1080 = vmul.f32 %v996, 1.442695
        %v1081 = vpow.pop %v1080
        %v1082 = vmul.f32 %v997, 1.442695
        %v1083 = vpow.pop %v1082
        %v1084 = vmul.f32 %v998, 1.442695
        %v1085 = vpow.pop %v1084
        %v1086 = vmul.f32 %v999, 1.442695
        %v1087 = vpow.pop %v1086
        %v1088 = vmul.f32 %v1000, 1.442695
        %v1089 = vpow.pop %v1088
        %v1090 = vmul.f32 %v1001, 1.442695
        %v1091 = vpow.pop %v1090
        %v1092 = vmul.f32 %v1002, 1.442695
        %v1093 = vpow.pop %v1092
        %v1094 = vmul.f32 %v1003, 1.442695
        %v1095 = vpow.pop %v1094
        %v1096 = vmul.f32 %v1004, 1.442695
        %v1097 = vpow.pop %v1096
        %v1098 = vmul.f32 %v1005, 1.442695
        %v1099 = vpow.pop %v1098
        %v1100 = vmul.f32 %v1006, 1.442695
        %v1101 = vpow.pop %v1100
        %v1102 = vmul.f32 %v1007, 1.442695
        %v1103 = vpow.pop %v1102
        %v1104 = vadd.f32 %v1009, 0.0
        %v1105 = vadd.f32 %v1015, 0.0
        %v1106 = vadd.f32 %v1021, 0.0
        %v1107 = vadd.f32 %v1027, 0.0
        %v1108 = vadd.f32 %v1033, 0.0
        %v1109 = vadd.f32 %v1039, 0.0
        %v1110 = vadd.f32 %v1045, 0.0
        %v1111 = vadd.f32 %v1051, 0.0
        %v1112 = vadd.f32 %v1057, 0.0
        %v1113 = vadd.f32 %v1063, 0.0
        %v1114 = vadd.f32 %v1069, 0.0
        %v1115 = vadd.f32 %v1075, 0.0
        %v1116 = vadd.f32 %v1081, 0.0
        %v1117 = vadd.f32 %v1087, 0.0
        %v1118 = vadd.f32 %v1093, 0.0
        %v1119 = vadd.f32 %v1099, 0.0
        %v1120 = vadd.f32 %v1104, %v1011
        %v1121 = vadd.f32 %v1105, %v1017
        %v1122 = vadd.f32 %v1106, %v1023
        %v1123 = vadd.f32 %v1107, %v1029
        %v1124 = vadd.f32 %v1108, %v1035
        %v1125 = vadd.f32 %v1109, %v1041
        %v1126 = vadd.f32 %v1110, %v1047
        %v1127 = vadd.f32 %v1111, %v1053
        %v1128 = vadd.f32 %v1112, %v1059
        %v1129 = vadd.f32 %v1113, %v1065
        %v1130 = vadd.f32 %v1114, %v1071
        %v1131 = vadd.f32 %v1115, %v1077
        %v1132 = vadd.f32 %v1116, %v1083
        %v1133 = vadd.f32 %v1117, %v1089
        %v1134 = vadd.f32 %v1118, %v1095
        %v1135 = vadd.f32 %v1119, %v1101
        %v1136 = vadd.f32 %v1013, 0.0
        %v1137 = vadd.f32 %v1019, 0.0
        %v1138 = vadd.f32 %v1025, 0.0
        %v1139 = vadd.f32 %v1031, 0.0
        %v1140 = vadd.f32 %v1037, 0.0
        %v1141 = vadd.f32 %v1043, 0.0
        %v1142 = vadd.f32 %v1049, 0.0
        %v1143 = vadd.f32 %v1055, 0.0
        %v1144 = vadd.f32 %v1061, 0.0
        %v1145 = vadd.f32 %v1067, 0.0
        %v1146 = vadd.f32 %v1073, 0.0
        %v1147 = vadd.f32 %v1079, 0.0
        %v1148 = vadd.f32 %v1085, 0.0
        %v1149 = vadd.f32 %v1091, 0.0
        %v1150 = vadd.f32 %v1097, 0.0
        %v1151 = vadd.f32 %v1103, 0.0
        %1152 = vst [vmem:[%s238] sm:$0xff] %v1120
        %1153 = vst [vmem:[%s238 + $0x8] sm:$0xff] %v1121
        %1154 = vst [vmem:[%s238 + $0x10] sm:$0xff] %v1122
        %1155 = vst [vmem:[%s238 + $0x18] sm:$0xff] %v1123
        %1156 = vst [vmem:[%s238 + $0x20] sm:$0xff] %v1124
        %1157 = vst [vmem:[%s238 + $0x28] sm:$0xff] %v1125
        %1158 = vst [vmem:[%s238 + $0x30] sm:$0xff] %v1126
        %1159 = vst [vmem:[%s238 + $0x38] sm:$0xff] %v1127
        %1160 = vst [vmem:[%s238 + $0x40] sm:$0xff] %v1128
        %1161 = vst [vmem:[%s238 + $0x48] sm:$0xff] %v1129
        %1162 = vst [vmem:[%s238 + $0x50] sm:$0xff] %v1130
        %1163 = vst [vmem:[%s238 + $0x58] sm:$0xff] %v1131
        %1164 = vst [vmem:[%s238 + $0x60] sm:$0xff] %v1132
        %1165 = vst [vmem:[%s238 + $0x68] sm:$0xff] %v1133
        %1166 = vst [vmem:[%s238 + $0x70] sm:$0xff] %v1134
        %1167 = vst [vmem:[%s238 + $0x78] sm:$0xff] %v1135
        %1168 = vst [vmem:[%s245] sm:$0xff] %v1136
        %1169 = vst [vmem:[%s245 + $0x8] sm:$0xff] %v1137
        %1170 = vst [vmem:[%s245 + $0x10] sm:$0xff] %v1138
        %1171 = vst [vmem:[%s245 + $0x18] sm:$0xff] %v1139
        %1172 = vst [vmem:[%s245 + $0x20] sm:$0xff] %v1140
        %1173 = vst [vmem:[%s245 + $0x28] sm:$0xff] %v1141
        %1174 = vst [vmem:[%s245 + $0x30] sm:$0xff] %v1142
        %1175 = vst [vmem:[%s245 + $0x38] sm:$0xff] %v1143
        %1176 = vst [vmem:[%s245 + $0x40] sm:$0xff] %v1144
        %1177 = vst [vmem:[%s245 + $0x48] sm:$0xff] %v1145
        %1178 = vst [vmem:[%s245 + $0x50] sm:$0xff] %v1146
        %1179 = vst [vmem:[%s245 + $0x58] sm:$0xff] %v1147
        %1180 = vst [vmem:[%s245 + $0x60] sm:$0xff] %v1148
        %1181 = vst [vmem:[%s245 + $0x68] sm:$0xff] %v1149
        %1182 = vst [vmem:[%s245 + $0x70] sm:$0xff] %v1150
        %1183 = vst [vmem:[%s245 + $0x78] sm:$0xff] %v1151
        %s1184 = sand.u32 %s125, 1
        %s1185 = scalar_lea.sflag [#allocation3], %s1184
        %s1186 = sand.u32 %s125, 1
        %s1187 = smul.addr %s1186, 128
        %s1188 = scalar_lea.vmem [#allocation2], %s1187
        %s1189 = sand.u32 %s151, 1
        %s1190 = scalar_lea.sflag [#allocation5], %s1189
        %s1191 = sand.u32 %s151, 1
        %s1192 = smul.addr %s1191, 128
        %s1193 = scalar_lea.vmem [#allocation4], %s1192
        // Predicated region
        $region37: #{tpu_custom_call.1} parent=35 // pred_check
          %p1194 = pneg %p135
        $region38: #{tpu_custom_call.1} parent=35 // pred_check_branch
          %1196 = sbr.rel (%p1194) target = $region40
        $region39: #{tpu_custom_call.1} parent=35 // pred_region
          %s1197 = smul.u32 16, %s23
          %1199 = vsyncadd %s1185, 0
          %s1200 = smul.addr %s1197, 8
          %s1201 = scalar_lea.hbm %s4, %s1200
          %s1202 = sshll.u32 %s1188, 4
          %s1203 = int_to_ptr.vmem [resolvable:$true] %s1202
          %s1204 = sshll.u32 %s1201, 4
          %s1205 = int_to_ptr.hbm [resolvable:$true] %s1204
          %1210 = dma.vmem_to_hbm [thread:$0]  %s1203, 2048, %s1205, %s1185, 128, 128, 8
        $region40: #{tpu_custom_call.1} parent=35 // pred_fallthru
          _
        // Predicated region
        $region41: #{tpu_custom_call.1} parent=35 // pred_check
          %p1211 = pneg %p161
        $region42: #{tpu_custom_call.1} parent=35 // pred_check_branch
          %1213 = sbr.rel (%p1211) target = $region44
        $region43: #{tpu_custom_call.1} parent=35 // pred_region
          %s1214 = smul.u32 16, %s23
          %1216 = vsyncadd %s1190, 0
          %s1217 = smul.addr %s1214, 8
          %s1218 = scalar_lea.hbm %s5, %s1217
          %s1219 = sshll.u32 %s1193, 4
          %s1220 = int_to_ptr.vmem [resolvable:$true] %s1219
          %s1221 = sshll.u32 %s1218, 4
          %s1222 = int_to_ptr.hbm [resolvable:$true] %s1221
          %1227 = dma.vmem_to_hbm [thread:$0]  %s1220, 2048, %s1222, %s1190, 128, 128, 8
        $region44: #{tpu_custom_call.1} parent=35 // pred_fallthru
          _
      $region36: #{tpu_custom_call.1} parent=5 // pred_fallthru
        _
      %p1228 = scmp.le.s32.totalorder 2, %s18
      // Predicated region
      $region45: #{tpu_custom_call.1} parent=5 // pred_check
        %p1229 = pneg %p1228
      $region46: #{tpu_custom_call.1} parent=5 // pred_check_branch
        %1231 = sbr.rel (%p1229) target = $region48
      $region47: #{tpu_custom_call.1} parent=5 // pred_region
        %s1232 = ssub.s32 %s18, 2
        // Predicated region
        $region49: #{tpu_custom_call.1} parent=47 // pred_check
          %p1233 = pneg %p141
        $region50: #{tpu_custom_call.1} parent=47 // pred_check_branch
          %1235 = sbr.rel (%p1233) target = $region52
        $region51: #{tpu_custom_call.1} parent=47 // pred_region
          %s1236 = sand.u32 %s126, 1
          %s1237 = scalar_lea.sflag [#allocation3], %s1236
          %s1238 = sand.u32 %s126, 1
          %s1239 = smul.addr %s1238, 128
          %s1240 = scalar_lea.vmem [#allocation2], %s1239
          %1242 = dma.done %s1237, 2048
        $region52: #{tpu_custom_call.1} parent=47 // pred_fallthru
          _
        // Predicated region
        $region53: #{tpu_custom_call.1} parent=47 // pred_check
          %p1243 = pneg %p167
        $region54: #{tpu_custom_call.1} parent=47 // pred_check_branch
          %1245 = sbr.rel (%p1243) target = $region56
        $region55: #{tpu_custom_call.1} parent=47 // pred_region
          %s1246 = sand.u32 %s152, 1
          %s1247 = scalar_lea.sflag [#allocation5], %s1246
          %s1248 = sand.u32 %s152, 1
          %s1249 = smul.addr %s1248, 128
          %s1250 = scalar_lea.vmem [#allocation4], %s1249
          %1252 = dma.done %s1247, 2048
        $region56: #{tpu_custom_call.1} parent=47 // pred_fallthru
          _
      $region48: #{tpu_custom_call.1} parent=5 // pred_fallthru
        _
    $region6: #{tpu_custom_call.1} parent=1 // loop_footer
      %s22 = sadd.s32 1, %s18
    $region7: #{tpu_custom_call.1} parent=1 // loop_footer_branch
      %17 = sbr.rel target = $region3
    $region8: #{tpu_custom_call.1} parent=1 // loop_exit
      _
    %1253 = vsyncpa [#allocation3], 1
    %s1254 = scalar_lea.sflag [#allocation3], 1
    %1255 = vsyncpa %s1254, 1
    %1256 = vsyncpa [#allocation5], 1
    %s1257 = scalar_lea.sflag [#allocation5], 1
    %1258 = vsyncpa %s1257, 1

// kernel: tpu_custom_call.1
$region0: #{tpu_custom_call.1}
  #allocation0 [shape = 'u32[]', space=smem, size = 0x4, offset = 0x4, fixed_abs, tag = 'smem constant byte address 0x4 - core index']
  #allocation1 [shape = 'u32[72,128]{1,0:T(1,128)}', space=vmem, size = 0x9000, scoped, tag = 'internal scratch']
  %s0 = inlined_call_operand.vmem [shape: f32[384,32], index: 0, kind: input, shape index: {}]
  %s1 = inlined_call_operand.vmem [shape: f32[384,1], index: 1, kind: input, shape index: {}]
  %s2 = inlined_call_operand.vmem [shape: f32[384,32], index: 2, kind: input, shape index: {}]
  %s3 = inlined_call_operand.vmem [shape: f32[1,384], index: 3, kind: input, shape index: {}]
  %s4 = inlined_call_operand.hbm [shape: f32[384,128], index: 4, kind: output, shape index: {0}]
  %s5 = inlined_call_operand.hbm [shape: f32[384,128], index: 5, kind: output, shape index: {1}]
  %6 = xla_tuple %s4, %s5
  %s7 = sld [smem:[#allocation0]]
  $region57: #{tpu_custom_call.1} parent=0
    _
  %s9 = ssub.s32 1, %s7
  %s10 = scalar_select 0, %s9, %s7
  $region1: #{tpu_custom_call.1} parent=0
    #allocation2 [shape = 'u8[131072]{0}', space=vmem, size = 0x20000, scoped, tag = 'output window, operand 0']
    #allocation3 [shape = 's32[2]{0}', space=sflag, size = 0x8, scoped, tag = 'scoped memory for tpu_custom_call.1']
    #allocation4 [shape = 'u8[131072]{0}', space=vmem, size = 0x20000, scoped, tag = 'output window, operand 1']
    #allocation5 [shape = 's32[2]{0}', space=sflag, size = 0x8, scoped, tag = 'scoped memory for tpu_custom_call.1']
    %11 = vsyncpa [#allocation3], 0
    %s12 = scalar_lea.sflag [#allocation3], 1
    %13 = vsyncpa %s12, 0
    %14 = vsyncpa [#allocation5], 0
    %s15 = scalar_lea.sflag [#allocation5], 1
    %16 = vsyncpa %s15, 0
    loop: start=0, step=1, limit=5
    $region2: #{tpu_custom_call.1} parent=1 // loop_pre_header
      _
    $region3: #{tpu_custom_call.1} parent=1 // loop_header
      %s18 = sphi 0, %s22
      %p19 = scmp.ge.s32.totalorder %s18, 5
      %s28 = sphi 0, %s30
      %s31 = sphi 0, %s28
      %s32 = sphi 0, %s31
      %s48 = sphi 0, %s32
      %s54 = sphi 0, %s56
      %s57 = sphi 0, %s54
      %s58 = sphi 0, %s57
      %s74 = sphi 0, %s58
      %s78 = sphi 0, %s78
      %s80 = sphi 0, %s78
      %s81 = sphi 0, %s80
      %s95 = sphi 0, %s81
      %s99 = sphi 0, %s99
      %s101 = sphi 0, %s99
      %s102 = sphi 0, %s101
      %s116 = sphi 0, %s102
      %s122 = sphi 0, %s124
      %s125 = sphi 0, %s122
      %s126 = sphi 0, %s125
      %s142 = sphi 0, %s126
      %s148 = sphi 0, %s150
      %s151 = sphi 0, %s148
      %s152 = sphi 0, %s151
      %s168 = sphi 0, %s152
    $region4: #{tpu_custom_call.1} parent=1 // loop_header_branch
      %21 = sbr.rel (%p19) target = $region8
    $region5: #{tpu_custom_call.1} parent=1 // loop_body
      %s23 = ssub.s32 %s18, 1
      %s24 = ssub.s32 %s18, 2
      %s25 = sadd.s32 %s18, 1
      %s26 = ssub.s32 %s18, %s25
      %p27 = scmp.eq.s32.totalorder %s26, 0
      %s29 = sadd.s32 %s28, 1
      %s30 = scalar_select %p27, %s28, %s29
      %p33 = pneg %p27
      %p34 = scmp.eq.s32.totalorder %s18, 2
      %p35 = por %p33, %p34
      %p36 = scmp.ne.s32.totalorder %s28, %s31
      %p37 = scmp.eq.s32.totalorder %s18, 0
      %p38 = por %p36, %p37
      %p39 = scmp.ne.s32.totalorder %s28, %s31
      %p40 = scmp.eq.s32.totalorder %s23, 2
      %p41 = por %p39, %p40
      %p42 = scmp.ne.s32.totalorder %s31, %s32
      %p43 = scmp.eq.s32.totalorder %s23, 0
      %p44 = por %p42, %p43
      %p45 = scmp.ne.s32.totalorder %s31, %s32
      %p46 = scmp.eq.s32.totalorder %s24, 2
      %p47 = por %p45, %p46
      %p49 = scmp.ne.s32.totalorder %s32, %s48
      %p50 = scmp.eq.s32.totalorder %s24, 0
      %p51 = por %p49, %p50
      %s52 = ssub.s32 %s18, %s25
      %p53 = scmp.eq.s32.totalorder %s52, 0
      %s55 = sadd.s32 %s54, 1
      %s56 = scalar_select %p53, %s54, %s55
      %p59 = pneg %p53
      %p60 = scmp.eq.s32.totalorder %s18, 2
      %p61 = por %p59, %p60
      %p62 = scmp.ne.s32.totalorder %s54, %s57
      %p63 = scmp.eq.s32.totalorder %s18, 0
      %p64 = por %p62, %p63
      %p65 = scmp.ne.s32.totalorder %s54, %s57
      %p66 = scmp.eq.s32.totalorder %s23, 2
      %p67 = por %p65, %p66
      %p68 = scmp.ne.s32.totalorder %s57, %s58
      %p69 = scmp.eq.s32.totalorder %s23, 0
      %p70 = por %p68, %p69
      %p71 = scmp.ne.s32.totalorder %s57, %s58
      %p72 = scmp.eq.s32.totalorder %s24, 2
      %p73 = por %p71, %p72
      %p75 = scmp.ne.s32.totalorder %s58, %s74
      %p76 = scmp.eq.s32.totalorder %s24, 0
      %p77 = por %p75, %p76
      %s79 = sadd.s32 %s78, 1
      %p82 = scmp.eq.s32.totalorder %s18, 2
      %p83 = scmp.ne.s32.totalorder %s78, %s80
      %p84 = scmp.eq.s32.totalorder %s18, 0
      %p85 = por %p83, %p84
      %p86 = scmp.ne.s32.totalorder %s78, %s80
      %p87 = scmp.eq.s32.totalorder %s23, 2
      %p88 = por %p86, %p87
      %p89 = scmp.ne.s32.totalorder %s80, %s81
      %p90 = scmp.eq.s32.totalorder %s23, 0
      %p91 = por %p89, %p90
      %p92 = scmp.ne.s32.totalorder %s80, %s81
      %p93 = scmp.eq.s32.totalorder %s24, 2
      %p94 = por %p92, %p93
      %p96 = scmp.ne.s32.totalorder %s81, %s95
      %p97 = scmp.eq.s32.totalorder %s24, 0
      %p98 = por %p96, %p97
      %s100 = sadd.s32 %s99, 1
      %p103 = scmp.eq.s32.totalorder %s18, 2
      %p104 = scmp.ne.s32.totalorder %s99, %s101
      %p105 = scmp.eq.s32.totalorder %s18, 0
      %p106 = por %p104, %p105
      %p107 = scmp.ne.s32.totalorder %s99, %s101
      %p108 = scmp.eq.s32.totalorder %s23, 2
      %p109 = por %p107, %p108
      %p110 = scmp.ne.s32.totalorder %s101, %s102
      %p111 = scmp.eq.s32.totalorder %s23, 0
      %p112 = por %p110, %p111
      %p113 = scmp.ne.s32.totalorder %s101, %s102
      %p114 = scmp.eq.s32.totalorder %s24, 2
      %p115 = por %p113, %p114
      %p117 = scmp.ne.s32.totalorder %s102, %s116
      %p118 = scmp.eq.s32.totalorder %s24, 0
      %p119 = por %p117, %p118
      %s120 = ssub.s32 %s18, %s25
      %p121 = scmp.eq.s32.totalorder %s120, 0
      %s123 = sadd.s32 %s122, 1
      %s124 = scalar_select %p121, %s122, %s123
      %p127 = pneg %p121
      %p128 = scmp.eq.s32.totalorder %s18, 2
      %p129 = por %p127, %p128
      %p130 = scmp.ne.s32.totalorder %s122, %s125
      %p131 = scmp.eq.s32.totalorder %s18, 0
      %p132 = por %p130, %p131
      %p133 = scmp.ne.s32.totalorder %s122, %s125
      %p134 = scmp.eq.s32.totalorder %s23, 2
      %p135 = por %p133, %p134
      %p136 = scmp.ne.s32.totalorder %s125, %s126
      %p137 = scmp.eq.s32.totalorder %s23, 0
      %p138 = por %p136, %p137
      %p139 = scmp.ne.s32.totalorder %s125, %s126
      %p140 = scmp.eq.s32.totalorder %s24, 2
      %p141 = por %p139, %p140
      %p143 = scmp.ne.s32.totalorder %s126, %s142
      %p144 = scmp.eq.s32.totalorder %s24, 0
      %p145 = por %p143, %p144
      %s146 = ssub.s32 %s18, %s25
      %p147 = scmp.eq.s32.totalorder %s146, 0
      %s149 = sadd.s32 %s148, 1
      %s150 = scalar_select %p147, %s148, %s149
      %p153 = pneg %p147
      %p154 = scmp.eq.s32.totalorder %s18, 2
      %p155 = por %p153, %p154
      %p156 = scmp.ne.s32.totalorder %s148, %s151
      %p157 = scmp.eq.s32.totalorder %s18, 0
      %p158 = por %p156, %p157
      %p159 = scmp.ne.s32.totalorder %s148, %s151
      %p160 = scmp.eq.s32.totalorder %s23, 2
      %p161 = por %p159, %p160
      %p162 = scmp.ne.s32.totalorder %s151, %s152
      %p163 = scmp.eq.s32.totalorder %s23, 0
      %p164 = por %p162, %p163
      %p165 = scmp.ne.s32.totalorder %s151, %s152
      %p166 = scmp.eq.s32.totalorder %s24, 2
      %p167 = por %p165, %p166
      %p169 = scmp.ne.s32.totalorder %s152, %s168
      %p170 = scmp.eq.s32.totalorder %s24, 0
      %p171 = por %p169, %p170
      %p172 = scmp.le.s32.totalorder 1, %s18
      %p173 = scmp.lt.s32.totalorder %s18, 4
      %p174 = pnand %p172, %p173
      %p175 = pneg %p174
      // Predicated region
      $region9: #{tpu_custom_call.1} parent=5 // pred_check
        _
      $region10: #{tpu_custom_call.1} parent=5 // pred_check_branch
        %177 = sbr.rel (%p174) target = $region12
      $region11: #{tpu_custom_call.1} parent=5 // pred_region
        %s178 = ssub.s32 %s18, 1
        // Predicated region
        $region13: #{tpu_custom_call.1} parent=11 // pred_check
          %p179 = pneg %p91
        $region14: #{tpu_custom_call.1} parent=11 // pred_check_branch
          %181 = sbr.rel (%p179) target = $region16
        $region15: #{tpu_custom_call.1} parent=11 // pred_region
          _
        $region16: #{tpu_custom_call.1} parent=11 // pred_fallthru
          _
        // Predicated region
        $region17: #{tpu_custom_call.1} parent=11 // pred_check
          %p182 = pneg %p112
        $region18: #{tpu_custom_call.1} parent=11 // pred_check_branch
          %184 = sbr.rel (%p182) target = $region20
        $region19: #{tpu_custom_call.1} parent=11 // pred_region
          _
        $region20: #{tpu_custom_call.1} parent=11 // pred_fallthru
          _
      $region12: #{tpu_custom_call.1} parent=5 // pred_fallthru
        _
      %p185 = scmp.lt.s32.totalorder %s18, 3
      // Predicated region
      $region21: #{tpu_custom_call.1} parent=5 // pred_check
        %p186 = pneg %p185
      $region22: #{tpu_custom_call.1} parent=5 // pred_check_branch
        %188 = sbr.rel (%p186) target = $region24
      $region23: #{tpu_custom_call.1} parent=5 // pred_region
        // Predicated region
        $region25: #{tpu_custom_call.1} parent=23 // pred_check
          %p189 = pneg %p38
        $region26: #{tpu_custom_call.1} parent=23 // pred_check_branch
          %191 = sbr.rel (%p189) target = $region28
        $region27: #{tpu_custom_call.1} parent=23 // pred_region
          %s192 = smul.u32 16, %s18
          %p193 = scmp.lt.s32.totalorder %s192, 47
          %s194 = scalar_select %p193, %s192, 47
          %s195 = smul.addr %s194, 8
          %s196 = scalar_lea.vmem %s0, %s195
          %s197 = smul.u32 16, %s18
        $region28: #{tpu_custom_call.1} parent=23 // pred_fallthru
          _
        // Predicated region
        $region29: #{tpu_custom_call.1} parent=23 // pred_check
          %p198 = pneg %p64
        $region30: #{tpu_custom_call.1} parent=23 // pred_check_branch
          %200 = sbr.rel (%p198) target = $region32
        $region31: #{tpu_custom_call.1} parent=23 // pred_region
          %s201 = smul.u32 16, %s18
          %p202 = scmp.lt.s32.totalorder %s201, 47
          %s203 = scalar_select %p202, %s201, 47
          %s204 = smul.addr %s203, 8
          %s205 = scalar_lea.vmem %s1, %s204
          %s206 = smul.u32 16, %s18
        $region32: #{tpu_custom_call.1} parent=23 // pred_fallthru
          _
      $region24: #{tpu_custom_call.1} parent=5 // pred_fallthru
        _
      %p207 = scmp.le.s32.totalorder 1, %s18
      %p208 = scmp.lt.s32.totalorder %s18, 4
      %p209 = pnand %p207, %p208
      %p210 = pneg %p209
      // Predicated region
      $region33: #{tpu_custom_call.1} parent=5 // pred_check
        _
      $region34: #{tpu_custom_call.1} parent=5 // pred_check_branch
        %212 = sbr.rel (%p209) target = $region36
      $region35: #{tpu_custom_call.1} parent=5 // pred_region
        %s213 = ssub.s32 %s18, 1
        %s214 = smul.u32 16, %s23
        %p215 = scmp.lt.s32.totalorder %s214, 47
        %s216 = scalar_select %p215, %s214, 47
        %s217 = smul.addr %s216, 8
        %s218 = scalar_lea.vmem %s0, %s217
        %p219 = pneg %p44
        %p220 = pneg %p41
        %s221 = smul.u32 16, %s23
        %p222 = scmp.lt.s32.totalorder %s221, 47
        %s223 = scalar_select %p222, %s221, 47
        %s224 = smul.addr %s223, 8
        %s225 = scalar_lea.vmem %s1, %s224
        %p226 = pneg %p70
        %p227 = pneg %p67
        %p228 = pneg %p91
        %p229 = pneg %p88
        %p230 = pneg %p112
        %p231 = pneg %p109
        %p232 = pneg %p138
        %p233 = pneg %p135
        %s234 = sand.u32 %s125, 1
        %s235 = scalar_lea.sflag [#allocation3], %s234
        %s236 = sand.u32 %s125, 1
        %s237 = smul.addr %s236, 128
        %s238 = scalar_lea.vmem [#allocation2], %s237
        %p239 = pneg %p164
        %p240 = pneg %p161
        %s241 = sand.u32 %s151, 1
        %s242 = scalar_lea.sflag [#allocation5], %s241
        %s243 = sand.u32 %s151, 1
        %s244 = smul.addr %s243, 128
        %s245 = scalar_lea.vmem [#allocation4], %s244
        %s246 = smul.u32 16, %s23
        %p247 = scmp.lt.s32.totalorder %s246, 47
        %s248 = scalar_select %p247, %s246, 47
        %s249 = smul.addr %s248, 8
        %s250 = scalar_lea.vmem %s0, %s249
        %s251 = smul.u32 16, %s23
        %s252 = smul.u32 16, %s23
        %p253 = scmp.lt.s32.totalorder %s252, 47
        %s254 = scalar_select %p253, %s252, 47
        %s255 = smul.addr %s254, 8
        %s256 = scalar_lea.vmem %s1, %s255
        %s257 = smul.u32 16, %s23
        %s258 = smul.u32 16, %s23
        %s259 = smul.u32 16, %s23
        %v260 = vld [vmem:[%s250] sm:$0xff]
        %v261 = vld [vmem:[%s250 + $0x8] sm:$0xff]
        %v262 = vld [vmem:[%s250 + $0x10] sm:$0xff]
        %v263 = vld [vmem:[%s250 + $0x18] sm:$0xff]
        %v264 = vld [vmem:[%s250 + $0x20] sm:$0xff]
        %v265 = vld [vmem:[%s250 + $0x28] sm:$0xff]
        %v266 = vld [vmem:[%s250 + $0x30] sm:$0xff]
        %v267 = vld [vmem:[%s250 + $0x38] sm:$0xff]
        %v268 = vld [vmem:[%s250 + $0x40] sm:$0xff]
        %v269 = vld [vmem:[%s250 + $0x48] sm:$0xff]
        %v270 = vld [vmem:[%s250 + $0x50] sm:$0xff]
        %v271 = vld [vmem:[%s250 + $0x58] sm:$0xff]
        %v272 = vld [vmem:[%s250 + $0x60] sm:$0xff]
        %v273 = vld [vmem:[%s250 + $0x68] sm:$0xff]
        %v274 = vld [vmem:[%s250 + $0x70] sm:$0xff]
        %v275 = vld [vmem:[%s250 + $0x78] sm:$0xff]
        %v276 = vld [vmem:[%s2] sm:$0xff]
        %v277 = vld [vmem:[%s2 + $0x8] sm:$0xff]
        %v278 = vld [vmem:[%s2 + $0x10] sm:$0xff]
        %v279 = vld [vmem:[%s2 + $0x18] sm:$0xff]
        %v280 = vld [vmem:[%s2 + $0x20] sm:$0xff]
        %v281 = vld [vmem:[%s2 + $0x28] sm:$0xff]
        %v282 = vld [vmem:[%s2 + $0x30] sm:$0xff]
        %v283 = vld [vmem:[%s2 + $0x38] sm:$0xff]
        %v284 = vld [vmem:[%s2 + $0x40] sm:$0xff]
        %v285 = vld [vmem:[%s2 + $0x48] sm:$0xff]
        %v286 = vld [vmem:[%s2 + $0x50] sm:$0xff]
        %v287 = vld [vmem:[%s2 + $0x58] sm:$0xff]
        %v288 = vld [vmem:[%s2 + $0x60] sm:$0xff]
        %v289 = vld [vmem:[%s2 + $0x68] sm:$0xff]
        %v290 = vld [vmem:[%s2 + $0x70] sm:$0xff]
        %v291 = vld [vmem:[%s2 + $0x78] sm:$0xff]
        %v292 = vld [vmem:[%s2 + $0x80] sm:$0xff]
        %v293 = vld [vmem:[%s2 + $0x88] sm:$0xff]
        %v294 = vld [vmem:[%s2 + $0x90] sm:$0xff]
        %v295 = vld [vmem:[%s2 + $0x98] sm:$0xff]
        %v296 = vld [vmem:[%s2 + $0xa0] sm:$0xff]
        %v297 = vld [vmem:[%s2 + $0xa8] sm:$0xff]
        %v298 = vld [vmem:[%s2 + $0xb0] sm:$0xff]
        %v299 = vld [vmem:[%s2 + $0xb8] sm:$0xff]
        %v300 = vld [vmem:[%s2 + $0xc0] sm:$0xff]
        %v301 = vld [vmem:[%s2 + $0xc8] sm:$0xff]
        %v302 = vld [vmem:[%s2 + $0xd0] sm:$0xff]
        %v303 = vld [vmem:[%s2 + $0xd8] sm:$0xff]
        %v304 = vld [vmem:[%s2 + $0xe0] sm:$0xff]
        %v305 = vld [vmem:[%s2 + $0xe8] sm:$0xff]
        %v306 = vld [vmem:[%s2 + $0xf0] sm:$0xff]
        %v307 = vld [vmem:[%s2 + $0xf8] sm:$0xff]
        %v308 = vld [vmem:[%s2 + $0x100] sm:$0xff]
        %v309 = vld [vmem:[%s2 + $0x108] sm:$0xff]
        %v310 = vld [vmem:[%s2 + $0x110] sm:$0xff]
        %v311 = vld [vmem:[%s2 + $0x118] sm:$0xff]
        %v312 = vld [vmem:[%s2 + $0x120] sm:$0xff]
        %v313 = vld [vmem:[%s2 + $0x128] sm:$0xff]
        %v314 = vld [vmem:[%s2 + $0x130] sm:$0xff]
        %v315 = vld [vmem:[%s2 + $0x138] sm:$0xff]
        %v316 = vld [vmem:[%s2 + $0x140] sm:$0xff]
        %v317 = vld [vmem:[%s2 + $0x148] sm:$0xff]
        %v318 = vld [vmem:[%s2 + $0x150] sm:$0xff]
        %v319 = vld [vmem:[%s2 + $0x158] sm:$0xff]
        %v320 = vld [vmem:[%s2 + $0x160] sm:$0xff]
        %v321 = vld [vmem:[%s2 + $0x168] sm:$0xff]
        %v322 = vld [vmem:[%s2 + $0x170] sm:$0xff]
        %v323 = vld [vmem:[%s2 + $0x178] sm:$0xff]
        %vm324 = vcmask 261120
        %v326 = vsel %vm324, %v260, 0
        %v329 = vsel %vm324, %v261, 0
        %v332 = vsel %vm324, %v262, 0
        %v335 = vsel %vm324, %v263, 0
        %v338 = vsel %vm324, %v264, 0
        %v341 = vsel %vm324, %v265, 0
        %v344 = vsel %vm324, %v266, 0
        %v347 = vsel %vm324, %v267, 0
        %v350 = vsel %vm324, %v268, 0
        %v353 = vsel %vm324, %v269, 0
        %v356 = vsel %vm324, %v270, 0
        %v359 = vsel %vm324, %v271, 0
        %v362 = vsel %vm324, %v272, 0
        %v365 = vsel %vm324, %v273, 0
        %v368 = vsel %vm324, %v274, 0
        %v371 = vsel %vm324, %v275, 0
        %v374 = vsel %vm324, %v276, 0
        %v377 = vsel %vm324, %v277, 0
        %v380 = vsel %vm324, %v278, 0
        %v383 = vsel %vm324, %v279, 0
        %v386 = vsel %vm324, %v280, 0
        %v389 = vsel %vm324, %v281, 0
        %v392 = vsel %vm324, %v282, 0
        %v395 = vsel %vm324, %v283, 0
        %v398 = vsel %vm324, %v284, 0
        %v401 = vsel %vm324, %v285, 0
        %v404 = vsel %vm324, %v286, 0
        %v407 = vsel %vm324, %v287, 0
        %v410 = vsel %vm324, %v288, 0
        %v413 = vsel %vm324, %v289, 0
        %v416 = vsel %vm324, %v290, 0
        %v419 = vsel %vm324, %v291, 0
        %v422 = vsel %vm324, %v292, 0
        %v425 = vsel %vm324, %v293, 0
        %v428 = vsel %vm324, %v294, 0
        %v431 = vsel %vm324, %v295, 0
        %v434 = vsel %vm324, %v296, 0
        %v437 = vsel %vm324, %v297, 0
        %v440 = vsel %vm324, %v298, 0
        %v443 = vsel %vm324, %v299, 0
        %v446 = vsel %vm324, %v300, 0
        %v449 = vsel %vm324, %v301, 0
        %v452 = vsel %vm324, %v302, 0
        %v455 = vsel %vm324, %v303, 0
        %v458 = vsel %vm324, %v304, 0
        %v461 = vsel %vm324, %v305, 0
        %v464 = vsel %vm324, %v306, 0
        %v467 = vsel %vm324, %v307, 0
        %v470 = vsel %vm324, %v308, 0
        %v473 = vsel %vm324, %v309, 0
        %v476 = vsel %vm324, %v310, 0
        %v479 = vsel %vm324, %v311, 0
        %v482 = vsel %vm324, %v312, 0
        %v485 = vsel %vm324, %v313, 0
        %v488 = vsel %vm324, %v314, 0
        %v491 = vsel %vm324, %v315, 0
        %v494 = vsel %vm324, %v316, 0
        %v497 = vsel %vm324, %v317, 0
        %v500 = vsel %vm324, %v318, 0
        %v503 = vsel %vm324, %v319, 0
        %v506 = vsel %vm324, %v320, 0
        %v509 = vsel %vm324, %v321, 0
        %v512 = vsel %vm324, %v322, 0
        %v515 = vsel %vm324, %v323, 0
        %517 = vmatpush.xpose.msra.mxu0 %v419
        %518 = vmatpush.xpose.msra.mxu0 %v416
        %519 = vmatpush.xpose.msra.mxu0 %v413
        %520 = vmatpush.xpose.msra.mxu0 %v410
        %521 = vmatpush.xpose.msra.mxu0 %v407
        %522 = vmatpush.xpose.msra.mxu0 %v404
        %523 = vmatpush.xpose.msra.mxu0 %v401
        %524 = vmatpush.xpose.msra.mxu0 %v398
        %525 = vmatpush.xpose.msra.mxu0 %v395
        %526 = vmatpush.xpose.msra.mxu0 %v392
        %527 = vmatpush.xpose.msra.mxu0 %v389
        %528 = vmatpush.xpose.msra.mxu0 %v386
        %529 = vmatpush.xpose.msra.mxu0 %v383
        %530 = vmatpush.xpose.msra.mxu0 %v380
        %531 = vmatpush.xpose.msra.mxu0 %v377
        %532 = vmatpush.xpose.msra.mxu0 %v374
        %533 = vmatmul.f32.gmra.mxu0 %v326
        %v534 = vpop.f32.mrf.mxu0
        %v535 = vadd.f32 0.0, %v534
        %536 = vmatmul.f32.gmra.mxu0 %v329
        %v537 = vpop.f32.mrf.mxu0
        %v538 = vadd.f32 0.0, %v537
        %539 = vmatmul.f32.gmra.mxu0 %v332
        %v540 = vpop.f32.mrf.mxu0
        %v541 = vadd.f32 0.0, %v540
        %542 = vmatmul.f32.gmra.mxu0 %v335
        %v543 = vpop.f32.mrf.mxu0
        %v544 = vadd.f32 0.0, %v543
        %545 = vmatmul.f32.gmra.mxu0 %v338
        %v546 = vpop.f32.mrf.mxu0
        %v547 = vadd.f32 0.0, %v546
        %548 = vmatmul.f32.gmra.mxu0 %v341
        %v549 = vpop.f32.mrf.mxu0
        %v550 = vadd.f32 0.0, %v549
        %551 = vmatmul.f32.gmra.mxu0 %v344
        %v552 = vpop.f32.mrf.mxu0
        %v553 = vadd.f32 0.0, %v552
        %554 = vmatmul.f32.gmra.mxu0 %v347
        %v555 = vpop.f32.mrf.mxu0
        %v556 = vadd.f32 0.0, %v555
        %557 = vmatmul.f32.gmra.mxu0 %v350
        %v558 = vpop.f32.mrf.mxu0
        %v559 = vadd.f32 0.0, %v558
        %560 = vmatmul.f32.gmra.mxu0 %v353
        %v561 = vpop.f32.mrf.mxu0
        %v562 = vadd.f32 0.0, %v561
        %563 = vmatmul.f32.gmra.mxu0 %v356
        %v564 = vpop.f32.mrf.mxu0
        %v565 = vadd.f32 0.0, %v564
        %566 = vmatmul.f32.gmra.mxu0 %v359
        %v567 = vpop.f32.mrf.mxu0
        %v568 = vadd.f32 0.0, %v567
        %569 = vmatmul.f32.gmra.mxu0 %v362
        %v570 = vpop.f32.mrf.mxu0
        %v571 = vadd.f32 0.0, %v570
        %572 = vmatmul.f32.gmra.mxu0 %v365
        %v573 = vpop.f32.mrf.mxu0
        %v574 = vadd.f32 0.0, %v573
        %575 = vmatmul.f32.gmra.mxu0 %v368
        %v576 = vpop.f32.mrf.mxu0
        %v577 = vadd.f32 0.0, %v576
        %578 = vmatmul.f32.gmra.mxu0 %v371
        %v579 = vpop.f32.mrf.mxu0
        %v580 = vadd.f32 0.0, %v579
        %581 = vdwg.mxu0
        %582 = vmatpush.xpose.msra.mxu0 %v467
        %583 = vmatpush.xpose.msra.mxu0 %v464
        %584 = vmatpush.xpose.msra.mxu0 %v461
        %585 = vmatpush.xpose.msra.mxu0 %v458
        %586 = vmatpush.xpose.msra.mxu0 %v455
        %587 = vmatpush.xpose.msra.mxu0 %v452
        %588 = vmatpush.xpose.msra.mxu0 %v449
        %589 = vmatpush.xpose.msra.mxu0 %v446
        %590 = vmatpush.xpose.msra.mxu0 %v443
        %591 = vmatpush.xpose.msra.mxu0 %v440
        %592 = vmatpush.xpose.msra.mxu0 %v437
        %593 = vmatpush.xpose.msra.mxu0 %v434
        %594 = vmatpush.xpose.msra.mxu0 %v431
        %595 = vmatpush.xpose.msra.mxu0 %v428
        %596 = vmatpush.xpose.msra.mxu0 %v425
        %597 = vmatpush.xpose.msra.mxu0 %v422
        %598 = vmatmul.f32.gmra.mxu0 %v326
        %v599 = vpop.f32.mrf.mxu0
        %v600 = vadd.f32 0.0, %v599
        %601 = vmatmul.f32.gmra.mxu0 %v329
        %v602 = vpop.f32.mrf.mxu0
        %v603 = vadd.f32 0.0, %v602
        %604 = vmatmul.f32.gmra.mxu0 %v332
        %v605 = vpop.f32.mrf.mxu0
        %v606 = vadd.f32 0.0, %v605
        %607 = vmatmul.f32.gmra.mxu0 %v335
        %v608 = vpop.f32.mrf.mxu0
        %v609 = vadd.f32 0.0, %v608
        %610 = vmatmul.f32.gmra.mxu0 %v338
        %v611 = vpop.f32.mrf.mxu0
        %v612 = vadd.f32 0.0, %v611
        %613 = vmatmul.f32.gmra.mxu0 %v341
        %v614 = vpop.f32.mrf.mxu0
        %v615 = vadd.f32 0.0, %v614
        %616 = vmatmul.f32.gmra.mxu0 %v344
        %v617 = vpop.f32.mrf.mxu0
        %v618 = vadd.f32 0.0, %v617
        %619 = vmatmul.f32.gmra.mxu0 %v347
        %v620 = vpop.f32.mrf.mxu0
        %v621 = vadd.f32 0.0, %v620
        %622 = vmatmul.f32.gmra.mxu0 %v350
        %v623 = vpop.f32.mrf.mxu0
        %v624 = vadd.f32 0.0, %v623
        %625 = vmatmul.f32.gmra.mxu0 %v353
        %v626 = vpop.f32.mrf.mxu0
        %v627 = vadd.f32 0.0, %v626
        %628 = vmatmul.f32.gmra.mxu0 %v356
        %v629 = vpop.f32.mrf.mxu0
        %v630 = vadd.f32 0.0, %v629
        %631 = vmatmul.f32.gmra.mxu0 %v359
        %v632 = vpop.f32.mrf.mxu0
        %v633 = vadd.f32 0.0, %v632
        %634 = vmatmul.f32.gmra.mxu0 %v362
        %v635 = vpop.f32.mrf.mxu0
        %v636 = vadd.f32 0.0, %v635
        %637 = vmatmul.f32.gmra.mxu0 %v365
        %v638 = vpop.f32.mrf.mxu0
        %v639 = vadd.f32 0.0, %v638
        %640 = vmatmul.f32.gmra.mxu0 %v368
        %v641 = vpop.f32.mrf.mxu0
        %v642 = vadd.f32 0.0, %v641
        %643 = vmatmul.f32.gmra.mxu0 %v371
        %v644 = vpop.f32.mrf.mxu0
        %v645 = vadd.f32 0.0, %v644
        %646 = vdwg.mxu0
        %647 = vmatpush.xpose.msra.mxu0 %v515
        %648 = vmatpush.xpose.msra.mxu0 %v512
        %649 = vmatpush.xpose.msra.mxu0 %v509
        %650 = vmatpush.xpose.msra.mxu0 %v506
        %651 = vmatpush.xpose.msra.mxu0 %v503
        %652 = vmatpush.xpose.msra.mxu0 %v500
        %653 = vmatpush.xpose.msra.mxu0 %v497
        %654 = vmatpush.xpose.msra.mxu0 %v494
        %655 = vmatpush.xpose.msra.mxu0 %v491
        %656 = vmatpush.xpose.msra.mxu0 %v488
        %657 = vmatpush.xpose.msra.mxu0 %v485
        %658 = vmatpush.xpose.msra.mxu0 %v482
        %659 = vmatpush.xpose.msra.mxu0 %v479
        %660 = vmatpush.xpose.msra.mxu0 %v476
        %661 = vmatpush.xpose.msra.mxu0 %v473
        %662 = vmatpush.xpose.msra.mxu0 %v470
        %663 = vmatmul.f32.gmra.mxu0 %v326
        %v664 = vpop.f32.mrf.mxu0
        %v665 = vadd.f32 0.0, %v664
        %666 = vmatmul.f32.gmra.mxu0 %v329
        %v667 = vpop.f32.mrf.mxu0
        %v668 = vadd.f32 0.0, %v667
        %669 = vmatmul.f32.gmra.mxu0 %v332
        %v670 = vpop.f32.mrf.mxu0
        %v671 = vadd.f32 0.0, %v670
        %672 = vmatmul.f32.gmra.mxu0 %v335
        %v673 = vpop.f32.mrf.mxu0
        %v674 = vadd.f32 0.0, %v673
        %675 = vmatmul.f32.gmra.mxu0 %v338
        %v676 = vpop.f32.mrf.mxu0
        %v677 = vadd.f32 0.0, %v676
        %678 = vmatmul.f32.gmra.mxu0 %v341
        %v679 = vpop.f32.mrf.mxu0
        %v680 = vadd.f32 0.0, %v679
        %681 = vmatmul.f32.gmra.mxu0 %v344
        %v682 = vpop.f32.mrf.mxu0
        %v683 = vadd.f32 0.0, %v682
        %684 = vmatmul.f32.gmra.mxu0 %v347
        %v685 = vpop.f32.mrf.mxu0
        %v686 = vadd.f32 0.0, %v685
        %687 = vmatmul.f32.gmra.mxu0 %v350
        %v688 = vpop.f32.mrf.mxu0
        %v689 = vadd.f32 0.0, %v688
        %690 = vmatmul.f32.gmra.mxu0 %v353
        %v691 = vpop.f32.mrf.mxu0
        %v692 = vadd.f32 0.0, %v691
        %693 = vmatmul.f32.gmra.mxu0 %v356
        %v694 = vpop.f32.mrf.mxu0
        %v695 = vadd.f32 0.0, %v694
        %696 = vmatmul.f32.gmra.mxu0 %v359
        %v697 = vpop.f32.mrf.mxu0
        %v698 = vadd.f32 0.0, %v697
        %699 = vmatmul.f32.gmra.mxu0 %v362
        %v700 = vpop.f32.mrf.mxu0
        %v701 = vadd.f32 0.0, %v700
        %702 = vmatmul.f32.gmra.mxu0 %v365
        %v703 = vpop.f32.mrf.mxu0
        %v704 = vadd.f32 0.0, %v703
        %705 = vmatmul.f32.gmra.mxu0 %v368
        %v706 = vpop.f32.mrf.mxu0
        %v707 = vadd.f32 0.0, %v706
        %708 = vmatmul.f32.gmra.mxu0 %v371
        %v709 = vpop.f32.mrf.mxu0
        %v710 = vadd.f32 0.0, %v709
        %711 = vdwg.mxu0
        %v712 = vld [vmem:[%s256] sm:$0xff]
        %v713 = vld [vmem:[%s256 + $0x8] sm:$0xff]
        %v714 = vld [vmem:[%s256 + $0x10] sm:$0xff]
        %v715 = vld [vmem:[%s256 + $0x18] sm:$0xff]
        %v716 = vld [vmem:[%s256 + $0x20] sm:$0xff]
        %v717 = vld [vmem:[%s256 + $0x28] sm:$0xff]
        %v718 = vld [vmem:[%s256 + $0x30] sm:$0xff]
        %v719 = vld [vmem:[%s256 + $0x38] sm:$0xff]
        %v720 = vld [vmem:[%s256 + $0x40] sm:$0xff]
        %v721 = vld [vmem:[%s256 + $0x48] sm:$0xff]
        %v722 = vld [vmem:[%s256 + $0x50] sm:$0xff]
        %v723 = vld [vmem:[%s256 + $0x58] sm:$0xff]
        %v724 = vld [vmem:[%s256 + $0x60] sm:$0xff]
        %v725 = vld [vmem:[%s256 + $0x68] sm:$0xff]
        %v726 = vld [vmem:[%s256 + $0x70] sm:$0xff]
        %v727 = vld [vmem:[%s256 + $0x78] sm:$0xff]
        %v728 = vld [vmem:[%s3] sm:$0x7]
        %730 = vset.pattern.permute.xlu0 0
        %731 = vperm.xlu0 %730, %v712
        %v732 = vpop.permute.xlu0 %731
        %735 = vset.pattern.permute.xlu0 0
        %736 = vperm.xlu0 %735, %v713
        %v737 = vpop.permute.xlu0 %736
        %740 = vset.pattern.permute.xlu0 0
        %741 = vperm.xlu0 %740, %v714
        %v742 = vpop.permute.xlu0 %741
        %745 = vset.pattern.permute.xlu0 0
        %746 = vperm.xlu0 %745, %v715
        %v747 = vpop.permute.xlu0 %746
        %750 = vset.pattern.permute.xlu0 0
        %751 = vperm.xlu0 %750, %v716
        %v752 = vpop.permute.xlu0 %751
        %755 = vset.pattern.permute.xlu0 0
        %756 = vperm.xlu0 %755, %v717
        %v757 = vpop.permute.xlu0 %756
        %760 = vset.pattern.permute.xlu0 0
        %761 = vperm.xlu0 %760, %v718
        %v762 = vpop.permute.xlu0 %761
        %765 = vset.pattern.permute.xlu0 0
        %766 = vperm.xlu0 %765, %v719
        %v767 = vpop.permute.xlu0 %766
        %770 = vset.pattern.permute.xlu0 0
        %771 = vperm.xlu0 %770, %v720
        %v772 = vpop.permute.xlu0 %771
        %775 = vset.pattern.permute.xlu0 0
        %776 = vperm.xlu0 %775, %v721
        %v777 = vpop.permute.xlu0 %776
        %780 = vset.pattern.permute.xlu0 0
        %781 = vperm.xlu0 %780, %v722
        %v782 = vpop.permute.xlu0 %781
        %785 = vset.pattern.permute.xlu0 0
        %786 = vperm.xlu0 %785, %v723
        %v787 = vpop.permute.xlu0 %786
        %790 = vset.pattern.permute.xlu0 0
        %791 = vperm.xlu0 %790, %v724
        %v792 = vpop.permute.xlu0 %791
        %795 = vset.pattern.permute.xlu0 0
        %796 = vperm.xlu0 %795, %v725
        %v797 = vpop.permute.xlu0 %796
        %800 = vset.pattern.permute.xlu0 0
        %801 = vperm.xlu0 %800, %v726
        %v802 = vpop.permute.xlu0 %801
        %805 = vset.pattern.permute.xlu0 0
        %806 = vperm.xlu0 %805, %v727
        %v807 = vpop.permute.xlu0 %806
        %v810 = vperm.slane %v728, 0
        %v811 = vperm.slane %v728, 1
        %v812 = vperm.slane %v728, 2
        %v816 = vadd.f32 %v732, %v810
        %v817 = vadd.f32 %v732, %v811
        %v818 = vadd.f32 %v732, %v812
        %v819 = vadd.f32 %v737, %v810
        %v820 = vadd.f32 %v737, %v811
        %v821 = vadd.f32 %v737, %v812
        %v822 = vadd.f32 %v742, %v810
        %v823 = vadd.f32 %v742, %v811
        %v824 = vadd.f32 %v742, %v812
        %v825 = vadd.f32 %v747, %v810
        %v826 = vadd.f32 %v747, %v811
        %v827 = vadd.f32 %v747, %v812
        %v828 = vadd.f32 %v752, %v810
        %v829 = vadd.f32 %v752, %v811
        %v830 = vadd.f32 %v752, %v812
        %v831 = vadd.f32 %v757, %v810
        %v832 = vadd.f32 %v757, %v811
        %v833 = vadd.f32 %v757, %v812
        %v834 = vadd.f32 %v762, %v810
        %v835 = vadd.f32 %v762, %v811
        %v836 = vadd.f32 %v762, %v812
        %v837 = vadd.f32 %v767, %v810
        %v838 = vadd.f32 %v767, %v811
        %v839 = vadd.f32 %v767, %v812
        %v840 = vadd.f32 %v772, %v810
        %v841 = vadd.f32 %v772, %v811
        %v842 = vadd.f32 %v772, %v812
        %v843 = vadd.f32 %v777, %v810
        %v844 = vadd.f32 %v777, %v811
        %v845 = vadd.f32 %v777, %v812
        %v846 = vadd.f32 %v782, %v810
        %v847 = vadd.f32 %v782, %v811
        %v848 = vadd.f32 %v782, %v812
        %v849 = vadd.f32 %v787, %v810
        %v850 = vadd.f32 %v787, %v811
        %v851 = vadd.f32 %v787, %v812
        %v852 = vadd.f32 %v792, %v810
        %v853 = vadd.f32 %v792, %v811
        %v854 = vadd.f32 %v792, %v812
        %v855 = vadd.f32 %v797, %v810
        %v856 = vadd.f32 %v797, %v811
        %v857 = vadd.f32 %v797, %v812
        %v858 = vadd.f32 %v802, %v810
        %v859 = vadd.f32 %v802, %v811
        %v860 = vadd.f32 %v802, %v812
        %v861 = vadd.f32 %v807, %v810
        %v862 = vadd.f32 %v807, %v811
        %v863 = vadd.f32 %v807, %v812
        %v864 = vmul.f32 %v535, 0.001953125
        %v865 = vmul.f32 %v600, 0.001953125
        %v866 = vmul.f32 %v665, 0.001953125
        %v867 = vmul.f32 %v538, 0.001953125
        %v868 = vmul.f32 %v603, 0.001953125
        %v869 = vmul.f32 %v668, 0.001953125
        %v870 = vmul.f32 %v541, 0.001953125
        %v871 = vmul.f32 %v606, 0.001953125
        %v872 = vmul.f32 %v671, 0.001953125
        %v873 = vmul.f32 %v544, 0.001953125
        %v874 = vmul.f32 %v609, 0.001953125
        %v875 = vmul.f32 %v674, 0.001953125
        %v876 = vmul.f32 %v547, 0.001953125
        %v877 = vmul.f32 %v612, 0.001953125
        %v878 = vmul.f32 %v677, 0.001953125
        %v879 = vmul.f32 %v550, 0.001953125
        %v880 = vmul.f32 %v615, 0.001953125
        %v881 = vmul.f32 %v680, 0.001953125
        %v882 = vmul.f32 %v553, 0.001953125
        %v883 = vmul.f32 %v618, 0.001953125
        %v884 = vmul.f32 %v683, 0.001953125
        %v885 = vmul.f32 %v556, 0.001953125
        %v886 = vmul.f32 %v621, 0.001953125
        %v887 = vmul.f32 %v686, 0.001953125
        %v888 = vmul.f32 %v559, 0.001953125
        %v889 = vmul.f32 %v624, 0.001953125
        %v890 = vmul.f32 %v689, 0.001953125
        %v891 = vmul.f32 %v562, 0.001953125
        %v892 = vmul.f32 %v627, 0.001953125
        %v893 = vmul.f32 %v692, 0.001953125
        %v894 = vmul.f32 %v565, 0.001953125
        %v895 = vmul.f32 %v630, 0.001953125
        %v896 = vmul.f32 %v695, 0.001953125
        %v897 = vmul.f32 %v568, 0.001953125
        %v898 = vmul.f32 %v633, 0.001953125
        %v899 = vmul.f32 %v698, 0.001953125
        %v900 = vmul.f32 %v571, 0.001953125
        %v901 = vmul.f32 %v636, 0.001953125
        %v902 = vmul.f32 %v701, 0.001953125
        %v903 = vmul.f32 %v574, 0.001953125
        %v904 = vmul.f32 %v639, 0.001953125
        %v905 = vmul.f32 %v704, 0.001953125
        %v906 = vmul.f32 %v577, 0.001953125
        %v907 = vmul.f32 %v642, 0.001953125
        %v908 = vmul.f32 %v707, 0.001953125
        %v909 = vmul.f32 %v580, 0.001953125
        %v910 = vmul.f32 %v645, 0.001953125
        %v911 = vmul.f32 %v710, 0.001953125
        %v912 = vadd.f32 %v816, %v864
        %v913 = vadd.f32 %v817, %v865
        %v914 = vadd.f32 %v818, %v866
        %v915 = vadd.f32 %v819, %v867
        %v916 = vadd.f32 %v820, %v868
        %v917 = vadd.f32 %v821, %v869
        %v918 = vadd.f32 %v822, %v870
        %v919 = vadd.f32 %v823, %v871
        %v920 = vadd.f32 %v824, %v872
        %v921 = vadd.f32 %v825, %v873
        %v922 = vadd.f32 %v826, %v874
        %v923 = vadd.f32 %v827, %v875
        %v924 = vadd.f32 %v828, %v876
        %v925 = vadd.f32 %v829, %v877
        %v926 = vadd.f32 %v830, %v878
        %v927 = vadd.f32 %v831, %v879
        %v928 = vadd.f32 %v832, %v880
        %v929 = vadd.f32 %v833, %v881
        %v930 = vadd.f32 %v834, %v882
        %v931 = vadd.f32 %v835, %v883
        %v932 = vadd.f32 %v836, %v884
        %v933 = vadd.f32 %v837, %v885
        %v934 = vadd.f32 %v838, %v886
        %v935 = vadd.f32 %v839, %v887
        %v936 = vadd.f32 %v840, %v888
        %v937 = vadd.f32 %v841, %v889
        %v938 = vadd.f32 %v842, %v890
        %v939 = vadd.f32 %v843, %v891
        %v940 = vadd.f32 %v844, %v892
        %v941 = vadd.f32 %v845, %v893
        %v942 = vadd.f32 %v846, %v894
        %v943 = vadd.f32 %v847, %v895
        %v944 = vadd.f32 %v848, %v896
        %v945 = vadd.f32 %v849, %v897
        %v946 = vadd.f32 %v850, %v898
        %v947 = vadd.f32 %v851, %v899
        %v948 = vadd.f32 %v852, %v900
        %v949 = vadd.f32 %v853, %v901
        %v950 = vadd.f32 %v854, %v902
        %v951 = vadd.f32 %v855, %v903
        %v952 = vadd.f32 %v856, %v904
        %v953 = vadd.f32 %v857, %v905
        %v954 = vadd.f32 %v858, %v906
        %v955 = vadd.f32 %v859, %v907
        %v956 = vadd.f32 %v860, %v908
        %v957 = vadd.f32 %v861, %v909
        %v958 = vadd.f32 %v862, %v910
        %v959 = vadd.f32 %v863, %v911
        %v960 = vmin.f32 %v912, 0.0
        %v961 = vmin.f32 %v913, 0.0
        %v962 = vmin.f32 %v914, 0.0
        %v963 = vmin.f32 %v915, 0.0
        %v964 = vmin.f32 %v916, 0.0
        %v965 = vmin.f32 %v917, 0.0
        %v966 = vmin.f32 %v918, 0.0
        %v967 = vmin.f32 %v919, 0.0
        %v968 = vmin.f32 %v920, 0.0
        %v969 = vmin.f32 %v921, 0.0
        %v970 = vmin.f32 %v922, 0.0
        %v971 = vmin.f32 %v923, 0.0
        %v972 = vmin.f32 %v924, 0.0
        %v973 = vmin.f32 %v925, 0.0
        %v974 = vmin.f32 %v926, 0.0
        %v975 = vmin.f32 %v927, 0.0
        %v976 = vmin.f32 %v928, 0.0
        %v977 = vmin.f32 %v929, 0.0
        %v978 = vmin.f32 %v930, 0.0
        %v979 = vmin.f32 %v931, 0.0
        %v980 = vmin.f32 %v932, 0.0
        %v981 = vmin.f32 %v933, 0.0
        %v982 = vmin.f32 %v934, 0.0
        %v983 = vmin.f32 %v935, 0.0
        %v984 = vmin.f32 %v936, 0.0
        %v985 = vmin.f32 %v937, 0.0
        %v986 = vmin.f32 %v938, 0.0
        %v987 = vmin.f32 %v939, 0.0
        %v988 = vmin.f32 %v940, 0.0
        %v989 = vmin.f32 %v941, 0.0
        %v990 = vmin.f32 %v942, 0.0
        %v991 = vmin.f32 %v943, 0.0
        %v992 = vmin.f32 %v944, 0.0
        %v993 = vmin.f32 %v945, 0.0
        %v994 = vmin.f32 %v946, 0.0
        %v995 = vmin.f32 %v947, 0.0
        %v996 = vmin.f32 %v948, 0.0
        %v997 = vmin.f32 %v949, 0.0
        %v998 = vmin.f32 %v950, 0.0
        %v999 = vmin.f32 %v951, 0.0
        %v1000 = vmin.f32 %v952, 0.0
        %v1001 = vmin.f32 %v953, 0.0
        %v1002 = vmin.f32 %v954, 0.0
        %v1003 = vmin.f32 %v955, 0.0
        %v1004 = vmin.f32 %v956, 0.0
        %v1005 = vmin.f32 %v957, 0.0
        %v1006 = vmin.f32 %v958, 0.0
        %v1007 = vmin.f32 %v959, 0.0
        %v1008 = vmul.f32 %v960, 1.442695
        %v1009 = vpow.pop %v1008
        %v1010 = vmul.f32 %v961, 1.442695
        %v1011 = vpow.pop %v1010
        %v1012 = vmul.f32 %v962, 1.442695
        %v1013 = vpow.pop %v1012
        %v1014 = vmul.f32 %v963, 1.442695
        %v1015 = vpow.pop %v1014
        %v1016 = vmul.f32 %v964, 1.442695
        %v1017 = vpow.pop %v1016
        %v1018 = vmul.f32 %v965, 1.442695
        %v1019 = vpow.pop %v1018
        %v1020 = vmul.f32 %v966, 1.442695
        %v1021 = vpow.pop %v1020
        %v1022 = vmul.f32 %v967, 1.442695
        %v1023 = vpow.pop %v1022
        %v1024 = vmul.f32 %v968, 1.442695
        %v1025 = vpow.pop %v1024
        %v1026 = vmul.f32 %v969, 1.442695
        %v1027 = vpow.pop %v1026
        %v1028 = vmul.f32 %v970, 1.442695
        %v1029 = vpow.pop %v1028
        %v1030 = vmul.f32 %v971, 1.442695
        %v1031 = vpow.pop %v1030
        %v1032 = vmul.f32 %v972, 1.442695
        %v1033 = vpow.pop %v1032
        %v1034 = vmul.f32 %v973, 1.442695
        %v1035 = vpow.pop %v1034
        %v1036 = vmul.f32 %v974, 1.442695
        %v1037 = vpow.pop %v1036
        %v1038 = vmul.f32 %v975, 1.442695
        %v1039 = vpow.pop %v1038
        %v1040 = vmul.f32 %v976, 1.442695
        %v1041 = vpow.pop %v1040
        %v1042 = vmul.f32 %v977, 1.442695
        %v1043 = vpow.pop %v1042
        %v1044 = vmul.f32 %v978, 1.442695
        %v1045 = vpow.pop %v1044
        %v1046 = vmul.f32 %v979, 1.442695
        %v1047 = vpow.pop %v1046
        %v1048 = vmul.f32 %v980, 1.442695
        %v1049 = vpow.pop %v1048
        %v1050 = vmul.f32 %v981, 1.442695
        %v1051 = vpow.pop %v1050
        %v1052 = vmul.f32 %v982, 1.442695
        %v1053 = vpow.pop %v1052
        %v1054 = vmul.f32 %v983, 1.442695
        %v1055 = vpow.pop %v1054
        %v1056 = vmul.f32 %v984, 1.442695
        %v1057 = vpow.pop %v1056
        %v1058 = vmul.f32 %v985, 1.442695
        %v1059 = vpow.pop %v1058
        %v1060 = vmul.f32 %v986, 1.442695
        %v1061 = vpow.pop %v1060
        %v1062 = vmul.f32 %v987, 1.442695
        %v1063 = vpow.pop %v1062
        %v1064 = vmul.f32 %v988, 1.442695
        %v1065 = vpow.pop %v1064
        %v1066 = vmul.f32 %v989, 1.442695
        %v1067 = vpow.pop %v1066
        %v1068 = vmul.f32 %v990, 1.442695
        %v1069 = vpow.pop %v1068
        %v1070 = vmul.f32 %v991, 1.442695
        %v1071 = vpow.pop %v1070
        %v1072 = vmul.f32 %v992, 1.442695
        %v1073 = vpow.pop %v1072
        %v1074 = vmul.f32 %v993, 1.442695
        %v1075 = vpow.pop %v1074
        %v1076 = vmul.f32 %v994, 1.442695
        %v1077 = vpow.pop %v1076
        %v1078 = vmul.f32 %v995, 1.442695
        %v1079 = vpow.pop %v1078
        %v1080 = vmul.f32 %v996, 1.442695
        %v1081 = vpow.pop %v1080
        %v1082 = vmul.f32 %v997, 1.442695
        %v1083 = vpow.pop %v1082
        %v1084 = vmul.f32 %v998, 1.442695
        %v1085 = vpow.pop %v1084
        %v1086 = vmul.f32 %v999, 1.442695
        %v1087 = vpow.pop %v1086
        %v1088 = vmul.f32 %v1000, 1.442695
        %v1089 = vpow.pop %v1088
        %v1090 = vmul.f32 %v1001, 1.442695
        %v1091 = vpow.pop %v1090
        %v1092 = vmul.f32 %v1002, 1.442695
        %v1093 = vpow.pop %v1092
        %v1094 = vmul.f32 %v1003, 1.442695
        %v1095 = vpow.pop %v1094
        %v1096 = vmul.f32 %v1004, 1.442695
        %v1097 = vpow.pop %v1096
        %v1098 = vmul.f32 %v1005, 1.442695
        %v1099 = vpow.pop %v1098
        %v1100 = vmul.f32 %v1006, 1.442695
        %v1101 = vpow.pop %v1100
        %v1102 = vmul.f32 %v1007, 1.442695
        %v1103 = vpow.pop %v1102
        %v1104 = vadd.f32 %v1009, 0.0
        %v1105 = vadd.f32 %v1015, 0.0
        %v1106 = vadd.f32 %v1021, 0.0
        %v1107 = vadd.f32 %v1027, 0.0
        %v1108 = vadd.f32 %v1033, 0.0
        %v1109 = vadd.f32 %v1039, 0.0
        %v1110 = vadd.f32 %v1045, 0.0
        %v1111 = vadd.f32 %v1051, 0.0
        %v1112 = vadd.f32 %v1057, 0.0
        %v1113 = vadd.f32 %v1063, 0.0
        %v1114 = vadd.f32 %v1069, 0.0
        %v1115 = vadd.f32 %v1075, 0.0
        %v1116 = vadd.f32 %v1081, 0.0
        %v1117 = vadd.f32 %v1087, 0.0
        %v1118 = vadd.f32 %v1093, 0.0
        %v1119 = vadd.f32 %v1099, 0.0
        %v1120 = vadd.f32 %v1104, %v1011
        %v1121 = vadd.f32 %v1105, %v1017
        %v1122 = vadd.f32 %v1106, %v1023
        %v1123 = vadd.f32 %v1107, %v1029
        %v1124 = vadd.f32 %v1108, %v1035
        %v1125 = vadd.f32 %v1109, %v1041
        %v1126 = vadd.f32 %v1110, %v1047
        %v1127 = vadd.f32 %v1111, %v1053
        %v1128 = vadd.f32 %v1112, %v1059
        %v1129 = vadd.f32 %v1113, %v1065
        %v1130 = vadd.f32 %v1114, %v1071
        %v1131 = vadd.f32 %v1115, %v1077
        %v1132 = vadd.f32 %v1116, %v1083
        %v1133 = vadd.f32 %v1117, %v1089
        %v1134 = vadd.f32 %v1118, %v1095
        %v1135 = vadd.f32 %v1119, %v1101
        %v1136 = vadd.f32 %v1013, 0.0
        %v1137 = vadd.f32 %v1019, 0.0
        %v1138 = vadd.f32 %v1025, 0.0
        %v1139 = vadd.f32 %v1031, 0.0
        %v1140 = vadd.f32 %v1037, 0.0
        %v1141 = vadd.f32 %v1043, 0.0
        %v1142 = vadd.f32 %v1049, 0.0
        %v1143 = vadd.f32 %v1055, 0.0
        %v1144 = vadd.f32 %v1061, 0.0
        %v1145 = vadd.f32 %v1067, 0.0
        %v1146 = vadd.f32 %v1073, 0.0
        %v1147 = vadd.f32 %v1079, 0.0
        %v1148 = vadd.f32 %v1085, 0.0
        %v1149 = vadd.f32 %v1091, 0.0
        %v1150 = vadd.f32 %v1097, 0.0
        %v1151 = vadd.f32 %v1103, 0.0
        %1152 = vst [vmem:[%s238] sm:$0xff] %v1120
        %1153 = vst [vmem:[%s238 + $0x8] sm:$0xff] %v1121
        %1154 = vst [vmem:[%s238 + $0x10] sm:$0xff] %v1122
        %1155 = vst [vmem:[%s238 + $0x18] sm:$0xff] %v1123
        %1156 = vst [vmem:[%s238 + $0x20] sm:$0xff] %v1124
        %1157 = vst [vmem:[%s238 + $0x28] sm:$0xff] %v1125
        %1158 = vst [vmem:[%s238 + $0x30] sm:$0xff] %v1126
        %1159 = vst [vmem:[%s238 + $0x38] sm:$0xff] %v1127
        %1160 = vst [vmem:[%s238 + $0x40] sm:$0xff] %v1128
        %1161 = vst [vmem:[%s238 + $0x48] sm:$0xff] %v1129
        %1162 = vst [vmem:[%s238 + $0x50] sm:$0xff] %v1130
        %1163 = vst [vmem:[%s238 + $0x58] sm:$0xff] %v1131
        %1164 = vst [vmem:[%s238 + $0x60] sm:$0xff] %v1132
        %1165 = vst [vmem:[%s238 + $0x68] sm:$0xff] %v1133
        %1166 = vst [vmem:[%s238 + $0x70] sm:$0xff] %v1134
        %1167 = vst [vmem:[%s238 + $0x78] sm:$0xff] %v1135
        %1168 = vst [vmem:[%s245] sm:$0xff] %v1136
        %1169 = vst [vmem:[%s245 + $0x8] sm:$0xff] %v1137
        %1170 = vst [vmem:[%s245 + $0x10] sm:$0xff] %v1138
        %1171 = vst [vmem:[%s245 + $0x18] sm:$0xff] %v1139
        %1172 = vst [vmem:[%s245 + $0x20] sm:$0xff] %v1140
        %1173 = vst [vmem:[%s245 + $0x28] sm:$0xff] %v1141
        %1174 = vst [vmem:[%s245 + $0x30] sm:$0xff] %v1142
        %1175 = vst [vmem:[%s245 + $0x38] sm:$0xff] %v1143
        %1176 = vst [vmem:[%s245 + $0x40] sm:$0xff] %v1144
        %1177 = vst [vmem:[%s245 + $0x48] sm:$0xff] %v1145
        %1178 = vst [vmem:[%s245 + $0x50] sm:$0xff] %v1146
        %1179 = vst [vmem:[%s245 + $0x58] sm:$0xff] %v1147
        %1180 = vst [vmem:[%s245 + $0x60] sm:$0xff] %v1148
        %1181 = vst [vmem:[%s245 + $0x68] sm:$0xff] %v1149
        %1182 = vst [vmem:[%s245 + $0x70] sm:$0xff] %v1150
        %1183 = vst [vmem:[%s245 + $0x78] sm:$0xff] %v1151
        %s1184 = sand.u32 %s125, 1
        %s1185 = scalar_lea.sflag [#allocation3], %s1184
        %s1186 = sand.u32 %s125, 1
        %s1187 = smul.addr %s1186, 128
        %s1188 = scalar_lea.vmem [#allocation2], %s1187
        %s1189 = sand.u32 %s151, 1
        %s1190 = scalar_lea.sflag [#allocation5], %s1189
        %s1191 = sand.u32 %s151, 1
        %s1192 = smul.addr %s1191, 128
        %s1193 = scalar_lea.vmem [#allocation4], %s1192
        // Predicated region
        $region37: #{tpu_custom_call.1} parent=35 // pred_check
          %p1194 = pneg %p135
        $region38: #{tpu_custom_call.1} parent=35 // pred_check_branch
          %1196 = sbr.rel (%p1194) target = $region40
        $region39: #{tpu_custom_call.1} parent=35 // pred_region
          %s1197 = smul.u32 16, %s23
          %1199 = vsyncadd %s1185, 0
          %s1200 = smul.addr %s1197, 8
          %s1201 = scalar_lea.hbm %s4, %s1200
          %s1202 = sshll.u32 %s1188, 4
          %s1203 = int_to_ptr.vmem [resolvable:$true] %s1202
          %s1204 = sshll.u32 %s1201, 4
          %s1205 = int_to_ptr.hbm [resolvable:$true] %s1204
          %1210 = dma.vmem_to_hbm [thread:$0]  %s1203, 2048, %s1205, %s1185, 128, 128, 8
        $region40: #{tpu_custom_call.1} parent=35 // pred_fallthru
          _
        // Predicated region
        $region41: #{tpu_custom_call.1} parent=35 // pred_check
          %p1211 = pneg %p161
        $region42: #{tpu_custom_call.1} parent=35 // pred_check_branch
          %1213 = sbr.rel (%p1211) target = $region44
        $region43: #{tpu_custom_call.1} parent=35 // pred_region
          %s1214 = smul.u32 16, %s23
          %1216 = vsyncadd %s1190, 0
          %s1217 = smul.addr %s1214, 8
          %s1218 = scalar_lea.hbm %s5, %s1217
          %s1219 = sshll.u32 %s1193, 4
          %s1220 = int_to_ptr.vmem [resolvable:$true] %s1219
          %s1221 = sshll.u32 %s1218, 4
          %s1222 = int_to_ptr.hbm [resolvable:$true] %s1221
          %1227 = dma.vmem_to_hbm [thread:$0]  %s1220, 2048, %s1222, %s1190, 128, 128, 8
        $region44: #{tpu_custom_call.1} parent=35 // pred_fallthru
          _
      $region36: #{tpu_custom_call.1} parent=5 // pred_fallthru
        _
      %p1228 = scmp.le.s32.totalorder 2, %s18
      // Predicated region
      $region45: #{tpu_custom_call.1} parent=5 // pred_check
        %p1229 = pneg %p1228
      $region46: #{tpu_custom_call.1} parent=5 // pred_check_branch
        %1231 = sbr.rel (%p1229) target = $region48
      $region47: #{tpu_custom_call.1} parent=5 // pred_region
        %s1232 = ssub.s32 %s18, 2
        // Predicated region
        $region49: #{tpu_custom_call.1} parent=47 // pred_check
          %p1233 = pneg %p141
        $region50: #{tpu_custom_call.1} parent=47 // pred_check_branch
          %1235 = sbr.rel (%p1233) target = $region52
        $region51: #{tpu_custom_call.1} parent=47 // pred_region
          %s1236 = sand.u32 %s126, 1
          %s1237 = scalar_lea.sflag [#allocation3], %s1236
          %s1238 = sand.u32 %s126, 1
          %s1239 = smul.addr %s1238, 128
          %s1240 = scalar_lea.vmem [#allocation2], %s1239
          %1242 = dma.done %s1237, 2048
        $region52: #{tpu_custom_call.1} parent=47 // pred_fallthru
          _
        // Predicated region
        $region53: #{tpu_custom_call.1} parent=47 // pred_check
          %p1243 = pneg %p167
        $region54: #{tpu_custom_call.1} parent=47 // pred_check_branch
          %1245 = sbr.rel (%p1243) target = $region56
        $region55: #{tpu_custom_call.1} parent=47 // pred_region
          %s1246 = sand.u32 %s152, 1
          %s1247 = scalar_lea.sflag [#allocation5], %s1246
          %s1248 = sand.u32 %s152, 1
          %s1249 = smul.addr %s1248, 128
          %s1250 = scalar_lea.vmem [#allocation4], %s1249
          %1252 = dma.done %s1247, 2048
        $region56: #{tpu_custom_call.1} parent=47 // pred_fallthru
          _
      $region48: #{tpu_custom_call.1} parent=5 // pred_fallthru
        _
    $region6: #{tpu_custom_call.1} parent=1 // loop_footer
      %s22 = sadd.s32 1, %s18
    $region7: #{tpu_custom_call.1} parent=1 // loop_footer_branch
      %17 = sbr.rel target = $region3
    $region8: #{tpu_custom_call.1} parent=1 // loop_exit
      _
    %1253 = vsyncpa [#allocation3], 1
    %s1254 = scalar_lea.sflag [#allocation3], 1
    %1255 = vsyncpa %s1254, 1
    %1256 = vsyncpa [#allocation5], 1
    %s1257 = scalar_lea.sflag [#allocation5], 1
    %1258 = vsyncpa %s1257, 1

</llo_original>
